<compile_context>
chip_gen: v6e
topology: v6e:2x2x1
jax: 0.10.0
libtpu: 0.0.40
codegen_flags: <defaults>
</compile_context>

<pallas_src>
import functools
import math

import jax
import jax.numpy as jnp
import numpy as np
from jax import lax
from jax.experimental import pallas as pl
from jax.experimental.pallas import tpu as pltpu


_SUB = 8                  # sublanes per inner compute chunk (one dense f32 vreg)
_LANES = 128              # lane width
_TILE_MIN_BLOCKS = 64     # >= ~1 MiB per input per grid step (64*128*30*4 B)
_TILE_MAX_BLOCKS = 256    # 256-block tile = 3.75 MiB/input/buffer (fits 32 MiB scoped VMEM)
_MIN_STEPS = 4            # target steps per split so DMA overlaps compute


def _round_up(x, m):
    return (x + m - 1) // m * m


def _core_splits():
    """Return (#splits along the leading grid axis, use core-parallel semantics)."""
    try:
        kind = jax.devices()[0].device_kind.lower()
    except Exception:
        return 1, False
    if "v7" in kind or "7x" in kind:   # 2 TensorCores per chip
        return 2, True
    return 1, False                    # v5e / v6e: single TC, avoid padding waste


# ---------------------------------------------------------------------------
# Pallas kernel
# ---------------------------------------------------------------------------
def _yolo_loss_kernel(bb_ref, gt_ref, out_ref, *,
                      l_coord, l_noobj, num_classes, S, C,
                      tile_g, num_steps):
    """One (30, tile_g, 128) tile of cells.

    out_ref is a (7, 8, 128) lane-wise partial-sum accumulator, resident across
    the reduction grid axis:
      0: no-object confidence term (l_noobj*b4^2 + b9^2), noobj-masked
      1: coord term (obj-masked)          2: responsible-box conf term
      3: class MSE                        4: non-responsible-box conf^2
      5: selected IoU                     6: object count
    """
    split = pl.program_id(0)
    step = pl.program_id(1)

    @pl.when(step == 0)
    def _init():
        out_ref[...] = jnp.zeros_like(out_ref)

    base_block = (split * num_steps + step) * tile_g   # global 128-cell block idx
    ss = S * S
    ssf = float(ss)
    sf = float(S)
    inv_ss = 1.0 / ssf
    inv_s = 1.0 / sf
    c_blk_f = float(C // _LANES)
    c_lane_f = float(C % _LANES)

    # Hoisted per-grid-step iotas (emitted once, not per chunk).
    sub_iota = lax.broadcasted_iota(jnp.int32, (_SUB, _LANES), 0)
    lane_f = lax.broadcasted_iota(jnp.int32, (_SUB, _LANES), 1).astype(jnp.float32)

    # Global block index of chunk 0 (f32, exact while < 2^24) and its value mod
    # S^2.  Both are advanced incrementally in the loop so the divide runs once
    # per grid step instead of once per (8,128) chunk.
    gblk0 = (sub_iota + base_block).astype(jnp.float32)
    m1_0 = gblk0 - jnp.floor(gblk0 / ssf) * ssf

    zeros = jnp.zeros((_SUB, _LANES), jnp.float32)
    init_accs = (zeros,) * 7
    num_chunks = tile_g // _SUB

    def chunk_body(sub, carry):
        accs, gblk_f, m1 = carry
        r0 = pl.multiple_of(sub * _SUB, _SUB)

        def bb(i):
            return bb_ref[i, pl.ds(r0, _SUB), :]

        def gt(i):
            return gt_ref[i, pl.ds(r0, _SUB), :]

        valid = (gblk_f < c_blk_f) | ((gblk_f == c_blk_f) & (lane_f < c_lane_f))

        # cell % S^2 -> (row, col) with exact small-integer f32 arithmetic,
        # using precomputed reciprocals (errors << 1/S^2, nudged by +1e-3).
        t = m1 * float(_LANES) + lane_f                 # integer, < 128*S^2 + 128
        q = jnp.floor(t * inv_ss + 1e-3)
        cell_ss = t - q * ssf                           # cell % S^2
        row_idx = jnp.floor(cell_ss * inv_s + 1e-3)     # grid row
        col_idx = cell_ss - row_idx * sf                # grid col
        grid_x = col_idx * 64.0
        grid_y = row_idx * 64.0

        # --- ground-truth corners: read once, shared by both IoUs -----------
        g0, g1, g2, g3 = gt(5), gt(6), gt(7), gt(8)
        g_area = (g2 - g0) * (g3 - g1)

        def iou(b0, b1, b2, b3):
            # Mirrors Loss.iou: int() truncation, clamp to image.
            pb0 = jnp.trunc(grid_x + b0 * 64.0)
            pb1 = jnp.trunc(grid_y + b1 * 64.0)
            pb2 = jnp.trunc(b2 * 448.0)
            pb3 = jnp.trunc(b3 * 448.0)
            pc0 = jnp.maximum(0.0, pb0 - pb2 * 0.5)
            pc1 = jnp.maximum(0.0, pb1 - pb3 * 0.5)
            pc2 = jnp.minimum(447.0, pb0 + pb2 * 0.5)
            pc3 = jnp.minimum(447.0, pb1 + pb3 * 0.5)
            p_area = (pc2 - pc0) * (pc3 - pc1)
            clx = jnp.maximum(pc0, g0)
            crx = jnp.minimum(pc2, g2)
            cuy = jnp.maximum(pc1, g1)
            cdy = jnp.minimum(pc3, g3)
            inter = (crx - clx) * (cdy - cuy)
            denom = p_area + g_area - inter
            safe = jnp.where(denom == 0.0, 1.0, denom)   # 0/0 -> 0 (see header)
            no_overlap = (crx < clx) | (cdy < cuy)
            return jnp.where(no_overlap, 0.0, inter / safe)

        b0, b1, b2, b3, b4 = bb(0), bb(1), bb(2), bb(3), bb(4)
        b5, b6, b7, b8, b9 = bb(5), bb(6), bb(7), bb(8), bb(9)

        iou1 = iou(b0, b1, b2, b3)
        iou2 = iou(b5, b6, b7, b8)
        use_one = iou1 > iou2

        gt9r = jnp.round(gt(9))
        obj = (gt9r != 0.0) & valid
        noobj = (gt9r == 0.0) & valid
        objf = obj.astype(jnp.float32)
        noobjf = noobj.astype(jnp.float32)

        # responsible / non-responsible box selection
        p0 = jnp.where(use_one, b0, b5)
        p1 = jnp.where(use_one, b1, b6)
        p2 = jnp.where(use_one, b2, b7)
        p3 = jnp.where(use_one, b3, b8)
        p4 = jnp.where(use_one, b4, b9)
        np4 = jnp.where(use_one, b9, b4)
        iou_sel = jnp.where(use_one, iou1, iou2)

        eps = 1e-8
        d0 = gt(0) - p0
        d1 = gt(1) - p1
        d2 = jnp.sqrt(gt(2) + eps) - jnp.sqrt(p2 + eps)
        d3 = jnp.sqrt(gt(3) + eps) - jnp.sqrt(p3 + eps)
        coord = l_coord * (d0 * d0 + d1 * d1 + d2 * d2 + d3 * d3)
        dc = p4 - iou_sel
        conf = dc * dc
        noobj_conf = np4 * np4
        # note: l_noobj scales only the first box here, as in the reference
        noobj_term = l_noobj * (b4 * b4) + b9 * b9

        # class MSE: two independent add chains (hide VALU latency)
        cls_a = jnp.zeros((_SUB, _LANES), jnp.float32)
        cls_b = jnp.zeros((_SUB, _LANES), jnp.float32)
        for k in range(0, num_classes - 1, 2):
            da = gt(10 + k) - bb(10 + k)
            db = gt(11 + k) - bb(11 + k)
            cls_a = cls_a + da * da
            cls_b = cls_b + db * db
        if num_classes % 2:
            dk = gt(10 + num_classes - 1) - bb(10 + num_classes - 1)
            cls_a = cls_a + dk * dk
        cls_mse = (cls_a + cls_b) * (1.0 / num_classes)

        new_accs = (
            accs[0] + noobjf * noobj_term,
            accs[1] + objf * coord,
            accs[2] + objf * conf,
            accs[3] + objf * cls_mse,
            accs[4] + objf * noobj_conf,
            accs[5] + objf * iou_sel,
            accs[6] + objf,
        )

        # advance carried index state to the next 8-sublane chunk
        gblk_n = gblk_f + float(_SUB)
        m1_n = m1 + float(_SUB)
        if ss > _SUB:
            m1_n = jnp.where(m1_n >= ssf, m1_n - ssf, m1_n)
        else:
            m1_n = m1_n - jnp.floor(m1_n / ssf) * ssf
        return new_accs, gblk_n, m1_n

    accs, _, _ = lax.fori_loop(
        0, num_chunks, chunk_body, (init_accs, gblk0, m1_0),
        unroll=min(2, max(1, num_chunks)))

    for t_i in range(7):
        out_ref[t_i] = out_ref[t_i] + accs[t_i]


# ---------------------------------------------------------------------------
# Wrapper
# ---------------------------------------------------------------------------
def yolo_loss(bounding_boxes, ground_truth, *, S=7, B=2, Classes=20,
              l_coord=5.0, l_noobj=0.5):
    assert B == 2, "kernel layout assumes B == 2 (rows 0..9 boxes, 10.. classes)"
    N = bounding_boxes.shape[0]
    Fb = B * 5 + Classes          # 30
    Fg = 10 + Classes             # 30
    C = N * S * S
    assert C > 0

    blocks = pl.cdiv(C, _LANES)

    num_splits, core_parallel = _core_splits()
    if blocks < 16:               # tiny batch: splitting only adds padded tiles
        num_splits, core_parallel = 1, False

    per_split = pl.cdiv(blocks, num_splits)

    # Tile / step selection: >= ~1 MiB DMA per input per step, <= 256-block
    # tiles, and >= _MIN_STEPS steps per split when blocks allow (overlap).
    max_steps_by_size = max(1, per_split // _TILE_MIN_BLOCKS)
    num_steps = min(_MIN_STEPS, max_steps_by_size)
    num_steps = max(num_steps, pl.cdiv(per_split, _TILE_MAX_BLOCKS))
    tile_g = _round_up(pl.cdiv(per_split, num_steps), _SUB)
    num_steps = pl.cdiv(per_split, tile_g)
    blocks_pad = num_splits * num_steps * tile_g
    Cpad = blocks_pad * _LANES

    # f32 index math in the kernel is exact only while block indices < ~2^23.
    assert blocks_pad < (1 << 23), "too many cells for exact f32 index math"

    def pack(x, F):
        # Feature-major relayout; with allow_input_fusion (+jit) XLA can fuse
        # this into the pallas_call input DMA instead of a separate HBM pass.
        # TODO(synk): have the producer emit (F, blocks, 128) directly.
        x = x.reshape(C, F).astype(jnp.float32).T          # (F, C)
        x = jnp.pad(x, ((0, 0), (0, Cpad - C)))            # zero-pad tail cells
        return x.reshape(F, blocks_pad, _LANES)

    bb = pack(bounding_boxes, Fb)
    gt = pack(ground_truth, Fg)

    kernel = functools.partial(
        _yolo_loss_kernel,
        l_coord=float(l_coord), l_noobj=float(l_noobj),
        num_classes=int(Classes), S=int(S), C=int(C),
        tile_g=int(tile_g), num_steps=int(num_steps))

    if core_parallel and num_splits > 1:
        dim_sems = (pltpu.CORE_PARALLEL, pltpu.ARBITRARY)   # v7x: both TCs
    else:
        dim_sems = ("arbitrary", "arbitrary")

    out = pl.pallas_call(
        kernel,
        out_shape=jax.ShapeDtypeStruct((num_splits, 7, _SUB, _LANES),
                                       jnp.float32),
        grid=(num_splits, num_steps),
        in_specs=[
            pl.BlockSpec((Fb, tile_g, _LANES),
                         lambda c, i: (0, c * num_steps + i, 0)),
            pl.BlockSpec((Fg, tile_g, _LANES),
                         lambda c, i: (0, c * num_steps + i, 0)),
        ],
        out_specs=pl.BlockSpec((None, 7, _SUB, _LANES),
                               lambda c, i: (c, 0, 0, 0)),
        compiler_params=pltpu.CompilerParams(
            dimension_semantics=dim_sems,
            vmem_limit_bytes=32 * 1024 * 1024,
            allow_input_fusion=[True, True],
        ),
    )(bb, gt)

    part = jnp.sum(out, axis=(0, 2, 3))        # (7,) partial sums
    noobj_s = part[0]
    coord_s = part[1]
    conf_s = part[2]
    cls_s = part[3]
    noobjc_s = part[4]
    iou_s = part[5]
    obj_n = part[6]

    loss = noobj_s + coord_s + conf_s + cls_s + l_noobj * noobjc_s
    loss_confidence = noobj_s + conf_s + noobjc_s
    return loss, coord_s, loss_confidence, cls_s, iou_s, obj_n


# ---------------------------------------------------------------------------
# Pure-numpy reference (mirrors the PyTorch loops) for self-validation
# ---------------------------------------------------------------------------
def _reference_loss(bb, gt, *, S=7, B=2, Classes=20, l_coord=5.0, l_noobj=0.5):
    bb = np.asarray(bb, dtype=np.float64)
    gt = np.asarray(gt, dtype=np.float64)

    def iou(box, gbox, gridX, gridY):
        b = np.asarray(box, dtype=np.float32)
        pb0 = float(np.trunc(np.float32(gridX) + b[0] * np.float32(64.0)))
        pb1 = float(np.trunc(np.float32(gridY) + b[1] * np.float32(64.0)))
        pb2 = float(np.trunc(b[2] * np.float32(448.0)))
        pb3 = float(np.trunc(b[3] * np.float32(448.0)))
        pc = [max(0.0, pb0 - pb2 / 2), max(0.0, pb1 - pb3 / 2),
              min(447.0, pb0 + pb2 / 2), min(447.0, pb1 + pb3 / 2)]
        p_area = (pc[2] - pc[0]) * (pc[3] - pc[1])
        gc = [gbox[5], gbox[6], gbox[7], gbox[8]]
        g_area = (gc[2] - gc[0]) * (gc[3] - gc[1])
        clx, crx = max(pc[0], gc[0]), min(pc[2], gc[2])
        cuy, cdy = max(pc[1], gc[1]), min(pc[3], gc[3])
        if crx < clx or cdy < cuy:
            return 0.0
        inter = (crx - clx) * (cdy - cuy)
        return inter / (p_area + g_area - inter)

    loss = loss_coord = loss_conf = loss_cls = iou_sum = 0.0
    obj_num = 0
    for b in range(bb.shape[0]):
        for r in range(S):
            for c in range(S):
                box = bb[b, r, c]
                g = gt[b, r, c]
                p_one, p_two = box[0:5], box[5:10]
                if round(float(g[9])) == 0:
                    loss += l_noobj * p_one[4] ** 2 + p_two[4] ** 2
                    loss_conf += l_noobj * p_one[4] ** 2 + p_two[4] ** 2
                else:
                    obj_num += 1
                    i1 = iou(p_one, g, c * 64, r * 64)
                    i2 = iou(p_two, g, c * 64, r * 64)
                    if i1 > i2:
                        pb, iv, npb = p_one, i1, p_two
                    else:
                        pb, iv, npb = p_two, i2, p_one
                    coord = l_coord * ((g[0] - pb[0]) ** 2 + (g[1] - pb[1]) ** 2
                                       + (math.sqrt(g[2] + 1e-8) - math.sqrt(pb[2] + 1e-8)) ** 2
                                       + (math.sqrt(g[3] + 1e-8) - math.sqrt(pb[3] + 1e-8)) ** 2)
                    loss += coord
                    loss_coord += coord
                    loss += (pb[4] - iv) ** 2
                    loss_conf += (pb[4] - iv) ** 2
                    iou_sum += iv
                    mse = float(np.mean((g[10:] - box[B * 5:]) ** 2))
                    loss += mse
                    loss_cls += mse
                    loss += l_noobj * npb[4] ** 2
                    loss_conf += npb[4] ** 2
    return loss, loss_coord, loss_conf, loss_cls, iou_sum, obj_num


# ---------------------------------------------------------------------------
# Main
# ---------------------------------------------------------------------------
if __name__ == "__main__":
    N, S, B, Classes = 2, 7, 2, 20
    key = jax.random.PRNGKey(0)
    k1, k2, k3, k4, k5 = jax.random.split(key, 5)

    # predictions: (N, S, S, B*5 + Classes) in [0, 1]
    bounding_boxes = jax.random.uniform(k1, (N, S, S, B * 5 + Classes),
                                        dtype=jnp.float32)

    # ground truth: (N, S, S, 10 + Classes)
    #   [0:4]  normalized x, y (within cell) and w, h
    #   [5:9]  ground box corners in pixel space (x1, y1, x2, y2)
    #   [9]    objectness (0/1)
    #   [10:]  class targets
    objness = (jax.random.uniform(k2, (N, S, S)) > 0.5).astype(jnp.float32)
    xy = jax.random.uniform(k3, (N, S, S, 2), dtype=jnp.float32)
    wh = jax.random.uniform(k4, (N, S, S, 2), minval=0.1, maxval=0.6,
                            dtype=jnp.float32)
    cls = jax.random.uniform(k5, (N, S, S, Classes), dtype=jnp.float32)

    cols = jnp.arange(S, dtype=jnp.float32) * 64.0
    rows = jnp.arange(S, dtype=jnp.float32) * 64.0
    cx = cols[None, None, :] + xy[..., 0] * 64.0
    cy = rows[None, :, None] + xy[..., 1] * 64.0
    w = wh[..., 0] * 448.0
    h = wh[..., 1] * 448.0
    x1 = jnp.clip(cx - w / 2, 0.0, 447.0)
    y1 = jnp.clip(cy - h / 2, 0.0, 447.0)
    x2 = jnp.clip(cx + w / 2, 0.0, 447.0)
    y2 = jnp.clip(cy + h / 2, 0.0, 447.0)

    ground_truth = jnp.concatenate(
        [xy[..., 0:1], xy[..., 1:2], wh[..., 0:1], wh[..., 1:2],
         jnp.zeros((N, S, S, 1), jnp.float32),
         x1[..., None], y1[..., None], x2[..., None], y2[..., None],
         objness[..., None], cls], axis=-1).astype(jnp.float32)

    loss_fn = jax.jit(functools.partial(yolo_loss, S=S, B=B, Classes=Classes,
                                        l_coord=5.0, l_noobj=0.5))
    result = loss_fn(bounding_boxes, ground_truth)
    result = jax.block_until_ready(result)

    ref = _reference_loss(np.asarray(bounding_boxes), np.asarray(ground_truth),
                          S=S, B=B, Classes=Classes, l_coord=5.0, l_noobj=0.5)
    got = [float(x) for x in result]
    for g, r in zip(got, ref):
        np.testing.assert_allclose(g, float(r), rtol=2e-3, atol=2e-3)

    print("KERNEL_OK")
</pallas_src>

<mosaic_0001>
module attributes {stable_mosaic.version = 11 : i64} {
  func.func @_yolo_loss_kernel(%arg0: i32, %arg1: i32, %arg2: memref<30x8x128xf32, #tpu.memory_space<vmem>>, %arg3: memref<30x8x128xf32, #tpu.memory_space<vmem>>, %arg4: memref<1x7x8x128xf32, #tpu.memory_space<vmem>>) attributes {dimension_semantics = [#tpu.dimension_semantics<arbitrary>, #tpu.dimension_semantics<arbitrary>], iteration_bounds = array<i64: 1, 1>, scalar_prefetch = 0 : i64, scratch_operands = 0 : i64, tpu.core_type = #tpu.core_type<tc>, window_params = [{transform_indices = @transform_0, window_bounds = array<i64: 30, 8, 128>}, {transform_indices = @transform_1, window_bounds = array<i64: 30, 8, 128>}, {transform_indices = @transform_2, window_bounds = array<i64: 1, 7, 8, 128>}]} {
    %c0_i32 = arith.constant 0 : i32
    %0 = arith.cmpi eq, %arg1, %c0_i32 : i32
    %1 = arith.extui %0 : i1 to i32
    %c0_i32_0 = arith.constant 0 : i32
    %2 = arith.cmpi ne, %1, %c0_i32_0 : i32
    scf.if %2 {
      %cst_215 = arith.constant 0.000000e+00 : f32
      %557 = vector.broadcast %cst_215 : f32 to vector<7x8x128xf32>
      %c0_216 = arith.constant 0 : index
      %c0_217 = arith.constant 0 : index
      %c0_218 = arith.constant 0 : index
      %c0_219 = arith.constant 0 : index
      %558 = vector.load %arg4[%c0_216, %c0_217, %c0_218, %c0_219] : memref<1x7x8x128xf32, #tpu.memory_space<vmem>>, vector<1x7x8x128xf32>
      %559 = vector.shape_cast %558 : vector<1x7x8x128xf32> to vector<7x8x128xf32>
      %560 = vector.shape_cast %557 : vector<7x8x128xf32> to vector<1x7x8x128xf32>
      tpu.vector_store %arg4[%c0_216, %c0_217, %c0_218, %c0_219], %560 {strides = array<i32>} : memref<1x7x8x128xf32, #tpu.memory_space<vmem>>, vector<1x7x8x128xf32>,
    } else {
    }
    %c1_i32 = arith.constant 1 : i32
    %3 = arith.muli %arg0, %c1_i32 : i32
    %4 = arith.addi %3, %arg1 : i32
    %c8_i32 = arith.constant 8 : i32
    %5 = arith.muli %4, %c8_i32 : i32
    %6 = tpu.iota {dimensions = array<i32: 0>} : vector<8x128xi32>
    %7 = tpu.iota {dimensions = array<i32: 1>} : vector<8x128xi32>
    %8 = arith.sitofp %7 : vector<8x128xi32> to vector<8x128xf32>
    %9 = vector.broadcast %5 : i32 to vector<8x128xi32>
    %10 = arith.addi %6, %9 : vector<8x128xi32>
    %11 = arith.sitofp %10 : vector<8x128xi32> to vector<8x128xf32>
    %cst = arith.constant 4.900000e+01 : f32
    %12 = vector.broadcast %cst : f32 to vector<8x128xf32>
    %13 = arith.divf %11, %12 : vector<8x128xf32>
    %14 = math.floor %13 : vector<8x128xf32>
    %cst_1 = arith.constant 4.900000e+01 : f32
    %15 = vector.broadcast %cst_1 : f32 to vector<8x128xf32>
    %16 = arith.mulf %14, %15 : vector<8x128xf32>
    %17 = arith.subf %11, %16 : vector<8x128xf32>
    %cst_2 = arith.constant 0.000000e+00 : f32
    %18 = vector.broadcast %cst_2 : f32 to vector<8x128xf32>
    %c0_i32_3 = arith.constant 0 : i32
    %c8_i32_4 = arith.constant 8 : i32
    %19 = arith.muli %c0_i32_3, %c8_i32_4 : i32
    %20 = tpu.assume_multiple %19, 8 : i32
    %cst_5 = arith.constant 0.000000e+00 : f32
    %21 = vector.broadcast %cst_5 : f32 to vector<8x128xf32>
    %22 = arith.cmpf olt, %11, %21 : vector<8x128xf32>
    %cst_6 = arith.constant 0.000000e+00 : f32
    %23 = vector.broadcast %cst_6 : f32 to vector<8x128xf32>
    %24 = arith.cmpf oeq, %11, %23 : vector<8x128xf32>
    %cst_7 = arith.constant 9.800000e+01 : f32
    %25 = vector.broadcast %cst_7 : f32 to vector<8x128xf32>
    %26 = arith.cmpf olt, %8, %25 : vector<8x128xf32>
    %27 = arith.andi %24, %26 : vector<8x128xi1>
    %28 = arith.ori %22, %27 : vector<8x128xi1>
    %cst_8 = arith.constant 1.280000e+02 : f32
    %29 = vector.broadcast %cst_8 : f32 to vector<8x128xf32>
    %30 = arith.mulf %17, %29 : vector<8x128xf32>
    %31 = arith.addf %30, %8 : vector<8x128xf32>
    %cst_9 = arith.constant 0.0204081628 : f32
    %32 = vector.broadcast %cst_9 : f32 to vector<8x128xf32>
    %33 = arith.mulf %31, %32 : vector<8x128xf32>
    %cst_10 = arith.constant 1.000000e-03 : f32
    %34 = vector.broadcast %cst_10 : f32 to vector<8x128xf32>
    %35 = arith.addf %33, %34 : vector<8x128xf32>
    %36 = math.floor %35 : vector<8x128xf32>
    %cst_11 = arith.constant 4.900000e+01 : f32
    %37 = vector.broadcast %cst_11 : f32 to vector<8x128xf32>
    %38 = arith.mulf %36, %37 : vector<8x128xf32>
    %39 = arith.subf %31, %38 : vector<8x128xf32>
    %cst_12 = arith.constant 0.142857149 : f32
    %40 = vector.broadcast %cst_12 : f32 to vector<8x128xf32>
    %41 = arith.mulf %39, %40 : vector<8x128xf32>
    %cst_13 = arith.constant 1.000000e-03 : f32
    %42 = vector.broadcast %cst_13 : f32 to vector<8x128xf32>
    %43 = arith.addf %41, %42 : vector<8x128xf32>
    %44 = math.floor %43 : vector<8x128xf32>
    %cst_14 = arith.constant 7.000000e+00 : f32
    %45 = vector.broadcast %cst_14 : f32 to vector<8x128xf32>
    %46 = arith.mulf %44, %45 : vector<8x128xf32>
    %47 = arith.subf %39, %46 : vector<8x128xf32>
    %cst_15 = arith.constant 6.400000e+01 : f32
    %48 = vector.broadcast %cst_15 : f32 to vector<8x128xf32>
    %49 = arith.mulf %47, %48 : vector<8x128xf32>
    %cst_16 = arith.constant 6.400000e+01 : f32
    %50 = vector.broadcast %cst_16 : f32 to vector<8x128xf32>
    %51 = arith.mulf %44, %50 : vector<8x128xf32>
    %c5 = arith.constant 5 : index
    %52 = arith.index_cast %20 : i32 to index
    %c0 = arith.constant 0 : index
    %53 = vector.load %arg3[%c5, %52, %c0] : memref<30x8x128xf32, #tpu.memory_space<vmem>>, vector<1x8x128xf32>
    %54 = vector.shape_cast %53 : vector<1x8x128xf32> to vector<8x128xf32>
    %c6 = arith.constant 6 : index
    %55 = arith.index_cast %20 : i32 to index
    %c0_17 = arith.constant 0 : index
    %56 = vector.load %arg3[%c6, %55, %c0_17] : memref<30x8x128xf32, #tpu.memory_space<vmem>>, vector<1x8x128xf32>
    %57 = vector.shape_cast %56 : vector<1x8x128xf32> to vector<8x128xf32>
    %c7 = arith.constant 7 : index
    %58 = arith.index_cast %20 : i32 to index
    %c0_18 = arith.constant 0 : index
    %59 = vector.load %arg3[%c7, %58, %c0_18] : memref<30x8x128xf32, #tpu.memory_space<vmem>>, vector<1x8x128xf32>
    %60 = vector.shape_cast %59 : vector<1x8x128xf32> to vector<8x128xf32>
    %c8 = arith.constant 8 : index
    %61 = arith.index_cast %20 : i32 to index
    %c0_19 = arith.constant 0 : index
    %62 = vector.load %arg3[%c8, %61, %c0_19] : memref<30x8x128xf32, #tpu.memory_space<vmem>>, vector<1x8x128xf32>
    %63 = vector.shape_cast %62 : vector<1x8x128xf32> to vector<8x128xf32>
    %64 = arith.subf %60, %54 : vector<8x128xf32>
    %65 = arith.subf %63, %57 : vector<8x128xf32>
    %66 = arith.mulf %64, %65 : vector<8x128xf32>
    %c0_20 = arith.constant 0 : index
    %67 = arith.index_cast %20 : i32 to index
    %c0_21 = arith.constant 0 : index
    %68 = vector.load %arg2[%c0_20, %67, %c0_21] : memref<30x8x128xf32, #tpu.memory_space<vmem>>, vector<1x8x128xf32>
    %69 = vector.shape_cast %68 : vector<1x8x128xf32> to vector<8x128xf32>
    %c1 = arith.constant 1 : index
    %70 = arith.index_cast %20 : i32 to index
    %c0_22 = arith.constant 0 : index
    %71 = vector.load %arg2[%c1, %70, %c0_22] : memref<30x8x128xf32, #tpu.memory_space<vmem>>, vector<1x8x128xf32>
    %72 = vector.shape_cast %71 : vector<1x8x128xf32> to vector<8x128xf32>
    %c2 = arith.constant 2 : index
    %73 = arith.index_cast %20 : i32 to index
    %c0_23 = arith.constant 0 : index
    %74 = vector.load %arg2[%c2, %73, %c0_23] : memref<30x8x128xf32, #tpu.memory_space<vmem>>, vector<1x8x128xf32>
    %75 = vector.shape_cast %74 : vector<1x8x128xf32> to vector<8x128xf32>
    %c3 = arith.constant 3 : index
    %76 = arith.index_cast %20 : i32 to index
    %c0_24 = arith.constant 0 : index
    %77 = vector.load %arg2[%c3, %76, %c0_24] : memref<30x8x128xf32, #tpu.memory_space<vmem>>, vector<1x8x128xf32>
    %78 = vector.shape_cast %77 : vector<1x8x128xf32> to vector<8x128xf32>
    %c4 = arith.constant 4 : index
    %79 = arith.index_cast %20 : i32 to index
    %c0_25 = arith.constant 0 : index
    %80 = vector.load %arg2[%c4, %79, %c0_25] : memref<30x8x128xf32, #tpu.memory_space<vmem>>, vector<1x8x128xf32>
    %81 = vector.shape_cast %80 : vector<1x8x128xf32> to vector<8x128xf32>
    %c5_26 = arith.constant 5 : index
    %82 = arith.index_cast %20 : i32 to index
    %c0_27 = arith.constant 0 : index
    %83 = vector.load %arg2[%c5_26, %82, %c0_27] : memref<30x8x128xf32, #tpu.memory_space<vmem>>, vector<1x8x128xf32>
    %84 = vector.shape_cast %83 : vector<1x8x128xf32> to vector<8x128xf32>
    %c6_28 = arith.constant 6 : index
    %85 = arith.index_cast %20 : i32 to index
    %c0_29 = arith.constant 0 : index
    %86 = vector.load %arg2[%c6_28, %85, %c0_29] : memref<30x8x128xf32, #tpu.memory_space<vmem>>, vector<1x8x128xf32>
    %87 = vector.shape_cast %86 : vector<1x8x128xf32> to vector<8x128xf32>
    %c7_30 = arith.constant 7 : index
    %88 = arith.index_cast %20 : i32 to index
    %c0_31 = arith.constant 0 : index
    %89 = vector.load %arg2[%c7_30, %88, %c0_31] : memref<30x8x128xf32, #tpu.memory_space<vmem>>, vector<1x8x128xf32>
    %90 = vector.shape_cast %89 : vector<1x8x128xf32> to vector<8x128xf32>
    %c8_32 = arith.constant 8 : index
    %91 = arith.index_cast %20 : i32 to index
    %c0_33 = arith.constant 0 : index
    %92 = vector.load %arg2[%c8_32, %91, %c0_33] : memref<30x8x128xf32, #tpu.memory_space<vmem>>, vector<1x8x128xf32>
    %93 = vector.shape_cast %92 : vector<1x8x128xf32> to vector<8x128xf32>
    %c9 = arith.constant 9 : index
    %94 = arith.index_cast %20 : i32 to index
    %c0_34 = arith.constant 0 : index
    %95 = vector.load %arg2[%c9, %94, %c0_34] : memref<30x8x128xf32, #tpu.memory_space<vmem>>, vector<1x8x128xf32>
    %96 = vector.shape_cast %95 : vector<1x8x128xf32> to vector<8x128xf32>
    %cst_35 = arith.constant 6.400000e+01 : f32
    %97 = vector.broadcast %cst_35 : f32 to vector<8x128xf32>
    %98 = arith.mulf %69, %97 : vector<8x128xf32>
    %99 = arith.addf %49, %98 : vector<8x128xf32>
    %cst_36 = arith.constant 0.000000e+00 : f32
    %100 = vector.broadcast %cst_36 : f32 to vector<8x128xf32>
    %101 = arith.cmpf olt, %99, %100 : vector<8x128xf32>
    %102 = math.ceil %99 : vector<8x128xf32>
    %103 = math.floor %99 : vector<8x128xf32>
    %104 = arith.select %101, %102, %103 : vector<8x128xi1>, vector<8x128xf32>
    %cst_37 = arith.constant 6.400000e+01 : f32
    %105 = vector.broadcast %cst_37 : f32 to vector<8x128xf32>
    %106 = arith.mulf %72, %105 : vector<8x128xf32>
    %107 = arith.addf %51, %106 : vector<8x128xf32>
    %cst_38 = arith.constant 0.000000e+00 : f32
    %108 = vector.broadcast %cst_38 : f32 to vector<8x128xf32>
    %109 = arith.cmpf olt, %107, %108 : vector<8x128xf32>
    %110 = math.ceil %107 : vector<8x128xf32>
    %111 = math.floor %107 : vector<8x128xf32>
    %112 = arith.select %109, %110, %111 : vector<8x128xi1>, vector<8x128xf32>
    %cst_39 = arith.constant 4.480000e+02 : f32
    %113 = vector.broadcast %cst_39 : f32 to vector<8x128xf32>
    %114 = arith.mulf %75, %113 : vector<8x128xf32>
    %cst_40 = arith.constant 0.000000e+00 : f32
    %115 = vector.broadcast %cst_40 : f32 to vector<8x128xf32>
    %116 = arith.cmpf olt, %114, %115 : vector<8x128xf32>
    %117 = math.ceil %114 : vector<8x128xf32>
    %118 = math.floor %114 : vector<8x128xf32>
    %119 = arith.select %116, %117, %118 : vector<8x128xi1>, vector<8x128xf32>
    %cst_41 = arith.constant 4.480000e+02 : f32
    %120 = vector.broadcast %cst_41 : f32 to vector<8x128xf32>
    %121 = arith.mulf %78, %120 : vector<8x128xf32>
    %cst_42 = arith.constant 0.000000e+00 : f32
    %122 = vector.broadcast %cst_42 : f32 to vector<8x128xf32>
    %123 = arith.cmpf olt, %121, %122 : vector<8x128xf32>
    %124 = math.ceil %121 : vector<8x128xf32>
    %125 = math.floor %121 : vector<8x128xf32>
    %126 = arith.select %123, %124, %125 : vector<8x128xi1>, vector<8x128xf32>
    %cst_43 = arith.constant 5.000000e-01 : f32
    %127 = vector.broadcast %cst_43 : f32 to vector<8x128xf32>
    %128 = arith.mulf %119, %127 : vector<8x128xf32>
    %129 = arith.subf %104, %128 : vector<8x128xf32>
    %cst_44 = arith.constant 0.000000e+00 : f32
    %130 = vector.broadcast %cst_44 : f32 to vector<8x128xf32>
    %131 = arith.maximumf %130, %129 : vector<8x128xf32>
    %cst_45 = arith.constant 5.000000e-01 : f32
    %132 = vector.broadcast %cst_45 : f32 to vector<8x128xf32>
    %133 = arith.mulf %126, %132 : vector<8x128xf32>
    %134 = arith.subf %112, %133 : vector<8x128xf32>
    %cst_46 = arith.constant 0.000000e+00 : f32
    %135 = vector.broadcast %cst_46 : f32 to vector<8x128xf32>
    %136 = arith.maximumf %135, %134 : vector<8x128xf32>
    %cst_47 = arith.constant 5.000000e-01 : f32
    %137 = vector.broadcast %cst_47 : f32 to vector<8x128xf32>
    %138 = arith.mulf %119, %137 : vector<8x128xf32>
    %139 = arith.addf %104, %138 : vector<8x128xf32>
    %cst_48 = arith.constant 4.470000e+02 : f32
    %140 = vector.broadcast %cst_48 : f32 to vector<8x128xf32>
    %141 = arith.minimumf %140, %139 : vector<8x128xf32>
    %cst_49 = arith.constant 5.000000e-01 : f32
    %142 = vector.broadcast %cst_49 : f32 to vector<8x128xf32>
    %143 = arith.mulf %126, %142 : vector<8x128xf32>
    %144 = arith.addf %112, %143 : vector<8x128xf32>
    %cst_50 = arith.constant 4.470000e+02 : f32
    %145 = vector.broadcast %cst_50 : f32 to vector<8x128xf32>
    %146 = arith.minimumf %145, %144 : vector<8x128xf32>
    %147 = arith.subf %141, %131 : vector<8x128xf32>
    %148 = arith.subf %146, %136 : vector<8x128xf32>
    %149 = arith.mulf %147, %148 : vector<8x128xf32>
    %150 = arith.maximumf %131, %54 : vector<8x128xf32>
    %151 = arith.minimumf %141, %60 : vector<8x128xf32>
    %152 = arith.maximumf %136, %57 : vector<8x128xf32>
    %153 = arith.minimumf %146, %63 : vector<8x128xf32>
    %154 = arith.subf %151, %150 : vector<8x128xf32>
    %155 = arith.subf %153, %152 : vector<8x128xf32>
    %156 = arith.mulf %154, %155 : vector<8x128xf32>
    %157 = arith.addf %149, %66 : vector<8x128xf32>
    %158 = arith.subf %157, %156 : vector<8x128xf32>
    %cst_51 = arith.constant 0.000000e+00 : f32
    %159 = vector.broadcast %cst_51 : f32 to vector<8x128xf32>
    %160 = arith.cmpf oeq, %158, %159 : vector<8x128xf32>
    %cst_52 = arith.constant 1.000000e+00 : f32
    %161 = vector.broadcast %cst_52 : f32 to vector<8x128xf32>
    %162 = arith.select %160, %161, %158 : vector<8x128xi1>, vector<8x128xf32>
    %163 = arith.cmpf olt, %151, %150 : vector<8x128xf32>
    %164 = arith.cmpf olt, %153, %152 : vector<8x128xf32>
    %165 = arith.ori %163, %164 : vector<8x128xi1>
    %166 = arith.divf %156, %162 : vector<8x128xf32>
    %cst_53 = arith.constant 0.000000e+00 : f32
    %167 = vector.broadcast %cst_53 : f32 to vector<8x128xf32>
    %168 = arith.select %165, %167, %166 : vector<8x128xi1>, vector<8x128xf32>
    %cst_54 = arith.constant 6.400000e+01 : f32
    %169 = vector.broadcast %cst_54 : f32 to vector<8x128xf32>
    %170 = arith.mulf %84, %169 : vector<8x128xf32>
    %171 = arith.addf %49, %170 : vector<8x128xf32>
    %cst_55 = arith.constant 0.000000e+00 : f32
    %172 = vector.broadcast %cst_55 : f32 to vector<8x128xf32>
    %173 = arith.cmpf olt, %171, %172 : vector<8x128xf32>
    %174 = math.ceil %171 : vector<8x128xf32>
    %175 = math.floor %171 : vector<8x128xf32>
    %176 = arith.select %173, %174, %175 : vector<8x128xi1>, vector<8x128xf32>
    %cst_56 = arith.constant 6.400000e+01 : f32
    %177 = vector.broadcast %cst_56 : f32 to vector<8x128xf32>
    %178 = arith.mulf %87, %177 : vector<8x128xf32>
    %179 = arith.addf %51, %178 : vector<8x128xf32>
    %cst_57 = arith.constant 0.000000e+00 : f32
    %180 = vector.broadcast %cst_57 : f32 to vector<8x128xf32>
    %181 = arith.cmpf olt, %179, %180 : vector<8x128xf32>
    %182 = math.ceil %179 : vector<8x128xf32>
    %183 = math.floor %179 : vector<8x128xf32>
    %184 = arith.select %181, %182, %183 : vector<8x128xi1>, vector<8x128xf32>
    %cst_58 = arith.constant 4.480000e+02 : f32
    %185 = vector.broadcast %cst_58 : f32 to vector<8x128xf32>
    %186 = arith.mulf %90, %185 : vector<8x128xf32>
    %cst_59 = arith.constant 0.000000e+00 : f32
    %187 = vector.broadcast %cst_59 : f32 to vector<8x128xf32>
    %188 = arith.cmpf olt, %186, %187 : vector<8x128xf32>
    %189 = math.ceil %186 : vector<8x128xf32>
    %190 = math.floor %186 : vector<8x128xf32>
    %191 = arith.select %188, %189, %190 : vector<8x128xi1>, vector<8x128xf32>
    %cst_60 = arith.constant 4.480000e+02 : f32
    %192 = vector.broadcast %cst_60 : f32 to vector<8x128xf32>
    %193 = arith.mulf %93, %192 : vector<8x128xf32>
    %cst_61 = arith.constant 0.000000e+00 : f32
    %194 = vector.broadcast %cst_61 : f32 to vector<8x128xf32>
    %195 = arith.cmpf olt, %193, %194 : vector<8x128xf32>
    %196 = math.ceil %193 : vector<8x128xf32>
    %197 = math.floor %193 : vector<8x128xf32>
    %198 = arith.select %195, %196, %197 : vector<8x128xi1>, vector<8x128xf32>
    %cst_62 = arith.constant 5.000000e-01 : f32
    %199 = vector.broadcast %cst_62 : f32 to vector<8x128xf32>
    %200 = arith.mulf %191, %199 : vector<8x128xf32>
    %201 = arith.subf %176, %200 : vector<8x128xf32>
    %cst_63 = arith.constant 0.000000e+00 : f32
    %202 = vector.broadcast %cst_63 : f32 to vector<8x128xf32>
    %203 = arith.maximumf %202, %201 : vector<8x128xf32>
    %cst_64 = arith.constant 5.000000e-01 : f32
    %204 = vector.broadcast %cst_64 : f32 to vector<8x128xf32>
    %205 = arith.mulf %198, %204 : vector<8x128xf32>
    %206 = arith.subf %184, %205 : vector<8x128xf32>
    %cst_65 = arith.constant 0.000000e+00 : f32
    %207 = vector.broadcast %cst_65 : f32 to vector<8x128xf32>
    %208 = arith.maximumf %207, %206 : vector<8x128xf32>
    %cst_66 = arith.constant 5.000000e-01 : f32
    %209 = vector.broadcast %cst_66 : f32 to vector<8x128xf32>
    %210 = arith.mulf %191, %209 : vector<8x128xf32>
    %211 = arith.addf %176, %210 : vector<8x128xf32>
    %cst_67 = arith.constant 4.470000e+02 : f32
    %212 = vector.broadcast %cst_67 : f32 to vector<8x128xf32>
    %213 = arith.minimumf %212, %211 : vector<8x128xf32>
    %cst_68 = arith.constant 5.000000e-01 : f32
    %214 = vector.broadcast %cst_68 : f32 to vector<8x128xf32>
    %215 = arith.mulf %198, %214 : vector<8x128xf32>
    %216 = arith.addf %184, %215 : vector<8x128xf32>
    %cst_69 = arith.constant 4.470000e+02 : f32
    %217 = vector.broadcast %cst_69 : f32 to vector<8x128xf32>
    %218 = arith.minimumf %217, %216 : vector<8x128xf32>
    %219 = arith.subf %213, %203 : vector<8x128xf32>
    %220 = arith.subf %218, %208 : vector<8x128xf32>
    %221 = arith.mulf %219, %220 : vector<8x128xf32>
    %222 = arith.maximumf %203, %54 : vector<8x128xf32>
    %223 = arith.minimumf %213, %60 : vector<8x128xf32>
    %224 = arith.maximumf %208, %57 : vector<8x128xf32>
    %225 = arith.minimumf %218, %63 : vector<8x128xf32>
    %226 = arith.subf %223, %222 : vector<8x128xf32>
    %227 = arith.subf %225, %224 : vector<8x128xf32>
    %228 = arith.mulf %226, %227 : vector<8x128xf32>
    %229 = arith.addf %221, %66 : vector<8x128xf32>
    %230 = arith.subf %229, %228 : vector<8x128xf32>
    %cst_70 = arith.constant 0.000000e+00 : f32
    %231 = vector.broadcast %cst_70 : f32 to vector<8x128xf32>
    %232 = arith.cmpf oeq, %230, %231 : vector<8x128xf32>
    %cst_71 = arith.constant 1.000000e+00 : f32
    %233 = vector.broadcast %cst_71 : f32 to vector<8x128xf32>
    %234 = arith.select %232, %233, %230 : vector<8x128xi1>, vector<8x128xf32>
    %235 = arith.cmpf olt, %223, %222 : vector<8x128xf32>
    %236 = arith.cmpf olt, %225, %224 : vector<8x128xf32>
    %237 = arith.ori %235, %236 : vector<8x128xi1>
    %238 = arith.divf %228, %234 : vector<8x128xf32>
    %cst_72 = arith.constant 0.000000e+00 : f32
    %239 = vector.broadcast %cst_72 : f32 to vector<8x128xf32>
    %240 = arith.select %237, %239, %238 : vector<8x128xi1>, vector<8x128xf32>
    %241 = arith.cmpf ogt, %168, %240 : vector<8x128xf32>
    %c9_73 = arith.constant 9 : index
    %242 = arith.index_cast %20 : i32 to index
    %c0_74 = arith.constant 0 : index
    %243 = vector.load %arg3[%c9_73, %242, %c0_74] : memref<30x8x128xf32, #tpu.memory_space<vmem>>, vector<1x8x128xf32>
    %244 = vector.shape_cast %243 : vector<1x8x128xf32> to vector<8x128xf32>
    %245 = math.roundeven %244 : vector<8x128xf32>
    %cst_75 = arith.constant 0.000000e+00 : f32
    %246 = vector.broadcast %cst_75 : f32 to vector<8x128xf32>
    %247 = arith.cmpf one, %245, %246 : vector<8x128xf32>
    %248 = arith.andi %247, %28 : vector<8x128xi1>
    %cst_76 = arith.constant 0.000000e+00 : f32
    %249 = vector.broadcast %cst_76 : f32 to vector<8x128xf32>
    %250 = arith.cmpf oeq, %245, %249 : vector<8x128xf32>
    %251 = arith.andi %250, %28 : vector<8x128xi1>
    %252 = arith.extui %248 : vector<8x128xi1> to vector<8x128xi32>
    %253 = arith.sitofp %252 : vector<8x128xi32> to vector<8x128xf32>
    %254 = arith.extui %251 : vector<8x128xi1> to vector<8x128xi32>
    %255 = arith.sitofp %254 : vector<8x128xi32> to vector<8x128xf32>
    %256 = arith.select %241, %69, %84 : vector<8x128xi1>, vector<8x128xf32>
    %257 = arith.select %241, %72, %87 : vector<8x128xi1>, vector<8x128xf32>
    %258 = arith.select %241, %75, %90 : vector<8x128xi1>, vector<8x128xf32>
    %259 = arith.select %241, %78, %93 : vector<8x128xi1>, vector<8x128xf32>
    %260 = arith.select %241, %81, %96 : vector<8x128xi1>, vector<8x128xf32>
    %261 = arith.select %241, %96, %81 : vector<8x128xi1>, vector<8x128xf32>
    %262 = arith.select %241, %168, %240 : vector<8x128xi1>, vector<8x128xf32>
    %c0_77 = arith.constant 0 : index
    %263 = arith.index_cast %20 : i32 to index
    %c0_78 = arith.constant 0 : index
    %264 = vector.load %arg3[%c0_77, %263, %c0_78] : memref<30x8x128xf32, #tpu.memory_space<vmem>>, vector<1x8x128xf32>
    %265 = vector.shape_cast %264 : vector<1x8x128xf32> to vector<8x128xf32>
    %266 = arith.subf %265, %256 : vector<8x128xf32>
    %c1_79 = arith.constant 1 : index
    %267 = arith.index_cast %20 : i32 to index
    %c0_80 = arith.constant 0 : index
    %268 = vector.load %arg3[%c1_79, %267, %c0_80] : memref<30x8x128xf32, #tpu.memory_space<vmem>>, vector<1x8x128xf32>
    %269 = vector.shape_cast %268 : vector<1x8x128xf32> to vector<8x128xf32>
    %270 = arith.subf %269, %257 : vector<8x128xf32>
    %c2_81 = arith.constant 2 : index
    %271 = arith.index_cast %20 : i32 to index
    %c0_82 = arith.constant 0 : index
    %272 = vector.load %arg3[%c2_81, %271, %c0_82] : memref<30x8x128xf32, #tpu.memory_space<vmem>>, vector<1x8x128xf32>
    %273 = vector.shape_cast %272 : vector<1x8x128xf32> to vector<8x128xf32>
    %cst_83 = arith.constant 9.99999993E-9 : f32
    %274 = vector.broadcast %cst_83 : f32 to vector<8x128xf32>
    %275 = arith.addf %273, %274 : vector<8x128xf32>
    %276 = math.sqrt %275 : vector<8x128xf32>
    %cst_84 = arith.constant 9.99999993E-9 : f32
    %277 = vector.broadcast %cst_84 : f32 to vector<8x128xf32>
    %278 = arith.addf %258, %277 : vector<8x128xf32>
    %279 = math.sqrt %278 : vector<8x128xf32>
    %280 = arith.subf %276, %279 : vector<8x128xf32>
    %c3_85 = arith.constant 3 : index
    %281 = arith.index_cast %20 : i32 to index
    %c0_86 = arith.constant 0 : index
    %282 = vector.load %arg3[%c3_85, %281, %c0_86] : memref<30x8x128xf32, #tpu.memory_space<vmem>>, vector<1x8x128xf32>
    %283 = vector.shape_cast %282 : vector<1x8x128xf32> to vector<8x128xf32>
    %cst_87 = arith.constant 9.99999993E-9 : f32
    %284 = vector.broadcast %cst_87 : f32 to vector<8x128xf32>
    %285 = arith.addf %283, %284 : vector<8x128xf32>
    %286 = math.sqrt %285 : vector<8x128xf32>
    %cst_88 = arith.constant 9.99999993E-9 : f32
    %287 = vector.broadcast %cst_88 : f32 to vector<8x128xf32>
    %288 = arith.addf %259, %287 : vector<8x128xf32>
    %289 = math.sqrt %288 : vector<8x128xf32>
    %290 = arith.subf %286, %289 : vector<8x128xf32>
    %291 = arith.mulf %266, %266 : vector<8x128xf32>
    %292 = arith.mulf %270, %270 : vector<8x128xf32>
    %293 = arith.addf %291, %292 : vector<8x128xf32>
    %294 = arith.mulf %280, %280 : vector<8x128xf32>
    %295 = arith.addf %293, %294 : vector<8x128xf32>
    %296 = arith.mulf %290, %290 : vector<8x128xf32>
    %297 = arith.addf %295, %296 : vector<8x128xf32>
    %cst_89 = arith.constant 5.000000e+00 : f32
    %298 = vector.broadcast %cst_89 : f32 to vector<8x128xf32>
    %299 = arith.mulf %298, %297 : vector<8x128xf32>
    %300 = arith.subf %260, %262 : vector<8x128xf32>
    %301 = arith.mulf %300, %300 : vector<8x128xf32>
    %302 = arith.mulf %261, %261 : vector<8x128xf32>
    %303 = arith.mulf %81, %81 : vector<8x128xf32>
    %cst_90 = arith.constant 5.000000e-01 : f32
    %304 = vector.broadcast %cst_90 : f32 to vector<8x128xf32>
    %305 = arith.mulf %304, %303 : vector<8x128xf32>
    %306 = arith.mulf %96, %96 : vector<8x128xf32>
    %307 = arith.addf %305, %306 : vector<8x128xf32>
    %cst_91 = arith.constant 0.000000e+00 : f32
    %308 = vector.broadcast %cst_91 : f32 to vector<8x128xf32>
    %cst_92 = arith.constant 0.000000e+00 : f32
    %309 = vector.broadcast %cst_92 : f32 to vector<8x128xf32>
    %c10 = arith.constant 10 : index
    %310 = arith.index_cast %20 : i32 to index
    %c0_93 = arith.constant 0 : index
    %311 = vector.load %arg3[%c10, %310, %c0_93] : memref<30x8x128xf32, #tpu.memory_space<vmem>>, vector<1x8x128xf32>
    %312 = vector.shape_cast %311 : vector<1x8x128xf32> to vector<8x128xf32>
    %c10_94 = arith.constant 10 : index
    %313 = arith.index_cast %20 : i32 to index
    %c0_95 = arith.constant 0 : index
    %314 = vector.load %arg2[%c10_94, %313, %c0_95] : memref<30x8x128xf32, #tpu.memory_space<vmem>>, vector<1x8x128xf32>
    %315 = vector.shape_cast %314 : vector<1x8x128xf32> to vector<8x128xf32>
    %316 = arith.subf %312, %315 : vector<8x128xf32>
    %c11 = arith.constant 11 : index
    %317 = arith.index_cast %20 : i32 to index
    %c0_96 = arith.constant 0 : index
    %318 = vector.load %arg3[%c11, %317, %c0_96] : memref<30x8x128xf32, #tpu.memory_space<vmem>>, vector<1x8x128xf32>
    %319 = vector.shape_cast %318 : vector<1x8x128xf32> to vector<8x128xf32>
    %c11_97 = arith.constant 11 : index
    %320 = arith.index_cast %20 : i32 to index
    %c0_98 = arith.constant 0 : index
    %321 = vector.load %arg2[%c11_97, %320, %c0_98] : memref<30x8x128xf32, #tpu.memory_space<vmem>>, vector<1x8x128xf32>
    %322 = vector.shape_cast %321 : vector<1x8x128xf32> to vector<8x128xf32>
    %323 = arith.subf %319, %322 : vector<8x128xf32>
    %324 = arith.mulf %316, %316 : vector<8x128xf32>
    %325 = arith.addf %308, %324 : vector<8x128xf32>
    %326 = arith.mulf %323, %323 : vector<8x128xf32>
    %327 = arith.addf %309, %326 : vector<8x128xf32>
    %c12 = arith.constant 12 : index
    %328 = arith.index_cast %20 : i32 to index
    %c0_99 = arith.constant 0 : index
    %329 = vector.load %arg3[%c12, %328, %c0_99] : memref<30x8x128xf32, #tpu.memory_space<vmem>>, vector<1x8x128xf32>
    %330 = vector.shape_cast %329 : vector<1x8x128xf32> to vector<8x128xf32>
    %c12_100 = arith.constant 12 : index
    %331 = arith.index_cast %20 : i32 to index
    %c0_101 = arith.constant 0 : index
    %332 = vector.load %arg2[%c12_100, %331, %c0_101] : memref<30x8x128xf32, #tpu.memory_space<vmem>>, vector<1x8x128xf32>
    %333 = vector.shape_cast %332 : vector<1x8x128xf32> to vector<8x128xf32>
    %334 = arith.subf %330, %333 : vector<8x128xf32>
    %c13 = arith.constant 13 : index
    %335 = arith.index_cast %20 : i32 to index
    %c0_102 = arith.constant 0 : index
    %336 = vector.load %arg3[%c13, %335, %c0_102] : memref<30x8x128xf32, #tpu.memory_space<vmem>>, vector<1x8x128xf32>
    %337 = vector.shape_cast %336 : vector<1x8x128xf32> to vector<8x128xf32>
    %c13_103 = arith.constant 13 : index
    %338 = arith.index_cast %20 : i32 to index
    %c0_104 = arith.constant 0 : index
    %339 = vector.load %arg2[%c13_103, %338, %c0_104] : memref<30x8x128xf32, #tpu.memory_space<vmem>>, vector<1x8x128xf32>
    %340 = vector.shape_cast %339 : vector<1x8x128xf32> to vector<8x128xf32>
    %341 = arith.subf %337, %340 : vector<8x128xf32>
    %342 = arith.mulf %334, %334 : vector<8x128xf32>
    %343 = arith.addf %325, %342 : vector<8x128xf32>
    %344 = arith.mulf %341, %341 : vector<8x128xf32>
    %345 = arith.addf %327, %344 : vector<8x128xf32>
    %c14 = arith.constant 14 : index
    %346 = arith.index_cast %20 : i32 to index
    %c0_105 = arith.constant 0 : index
    %347 = vector.load %arg3[%c14, %346, %c0_105] : memref<30x8x128xf32, #tpu.memory_space<vmem>>, vector<1x8x128xf32>
    %348 = vector.shape_cast %347 : vector<1x8x128xf32> to vector<8x128xf32>
    %c14_106 = arith.constant 14 : index
    %349 = arith.index_cast %20 : i32 to index
    %c0_107 = arith.constant 0 : index
    %350 = vector.load %arg2[%c14_106, %349, %c0_107] : memref<30x8x128xf32, #tpu.memory_space<vmem>>, vector<1x8x128xf32>
    %351 = vector.shape_cast %350 : vector<1x8x128xf32> to vector<8x128xf32>
    %352 = arith.subf %348, %351 : vector<8x128xf32>
    %c15 = arith.constant 15 : index
    %353 = arith.index_cast %20 : i32 to index
    %c0_108 = arith.constant 0 : index
    %354 = vector.load %arg3[%c15, %353, %c0_108] : memref<30x8x128xf32, #tpu.memory_space<vmem>>, vector<1x8x128xf32>
    %355 = vector.shape_cast %354 : vector<1x8x128xf32> to vector<8x128xf32>
    %c15_109 = arith.constant 15 : index
    %356 = arith.index_cast %20 : i32 to index
    %c0_110 = arith.constant 0 : index
    %357 = vector.load %arg2[%c15_109, %356, %c0_110] : memref<30x8x128xf32, #tpu.memory_space<vmem>>, vector<1x8x128xf32>
    %358 = vector.shape_cast %357 : vector<1x8x128xf32> to vector<8x128xf32>
    %359 = arith.subf %355, %358 : vector<8x128xf32>
    %360 = arith.mulf %352, %352 : vector<8x128xf32>
    %361 = arith.addf %343, %360 : vector<8x128xf32>
    %362 = arith.mulf %359, %359 : vector<8x128xf32>
    %363 = arith.addf %345, %362 : vector<8x128xf32>
    %c16 = arith.constant 16 : index
    %364 = arith.index_cast %20 : i32 to index
    %c0_111 = arith.constant 0 : index
    %365 = vector.load %arg3[%c16, %364, %c0_111] : memref<30x8x128xf32, #tpu.memory_space<vmem>>, vector<1x8x128xf32>
    %366 = vector.shape_cast %365 : vector<1x8x128xf32> to vector<8x128xf32>
    %c16_112 = arith.constant 16 : index
    %367 = arith.index_cast %20 : i32 to index
    %c0_113 = arith.constant 0 : index
    %368 = vector.load %arg2[%c16_112, %367, %c0_113] : memref<30x8x128xf32, #tpu.memory_space<vmem>>, vector<1x8x128xf32>
    %369 = vector.shape_cast %368 : vector<1x8x128xf32> to vector<8x128xf32>
    %370 = arith.subf %366, %369 : vector<8x128xf32>
    %c17 = arith.constant 17 : index
    %371 = arith.index_cast %20 : i32 to index
    %c0_114 = arith.constant 0 : index
    %372 = vector.load %arg3[%c17, %371, %c0_114] : memref<30x8x128xf32, #tpu.memory_space<vmem>>, vector<1x8x128xf32>
    %373 = vector.shape_cast %372 : vector<1x8x128xf32> to vector<8x128xf32>
    %c17_115 = arith.constant 17 : index
    %374 = arith.index_cast %20 : i32 to index
    %c0_116 = arith.constant 0 : index
    %375 = vector.load %arg2[%c17_115, %374, %c0_116] : memref<30x8x128xf32, #tpu.memory_space<vmem>>, vector<1x8x128xf32>
    %376 = vector.shape_cast %375 : vector<1x8x128xf32> to vector<8x128xf32>
    %377 = arith.subf %373, %376 : vector<8x128xf32>
    %378 = arith.mulf %370, %370 : vector<8x128xf32>
    %379 = arith.addf %361, %378 : vector<8x128xf32>
    %380 = arith.mulf %377, %377 : vector<8x128xf32>
    %381 = arith.addf %363, %380 : vector<8x128xf32>
    %c18 = arith.constant 18 : index
    %382 = arith.index_cast %20 : i32 to index
    %c0_117 = arith.constant 0 : index
    %383 = vector.load %arg3[%c18, %382, %c0_117] : memref<30x8x128xf32, #tpu.memory_space<vmem>>, vector<1x8x128xf32>
    %384 = vector.shape_cast %383 : vector<1x8x128xf32> to vector<8x128xf32>
    %c18_118 = arith.constant 18 : index
    %385 = arith.index_cast %20 : i32 to index
    %c0_119 = arith.constant 0 : index
    %386 = vector.load %arg2[%c18_118, %385, %c0_119] : memref<30x8x128xf32, #tpu.memory_space<vmem>>, vector<1x8x128xf32>
    %387 = vector.shape_cast %386 : vector<1x8x128xf32> to vector<8x128xf32>
    %388 = arith.subf %384, %387 : vector<8x128xf32>
    %c19 = arith.constant 19 : index
    %389 = arith.index_cast %20 : i32 to index
    %c0_120 = arith.constant 0 : index
    %390 = vector.load %arg3[%c19, %389, %c0_120] : memref<30x8x128xf32, #tpu.memory_space<vmem>>, vector<1x8x128xf32>
    %391 = vector.shape_cast %390 : vector<1x8x128xf32> to vector<8x128xf32>
    %c19_121 = arith.constant 19 : index
    %392 = arith.index_cast %20 : i32 to index
    %c0_122 = arith.constant 0 : index
    %393 = vector.load %arg2[%c19_121, %392, %c0_122] : memref<30x8x128xf32, #tpu.memory_space<vmem>>, vector<1x8x128xf32>
    %394 = vector.shape_cast %393 : vector<1x8x128xf32> to vector<8x128xf32>
    %395 = arith.subf %391, %394 : vector<8x128xf32>
    %396 = arith.mulf %388, %388 : vector<8x128xf32>
    %397 = arith.addf %379, %396 : vector<8x128xf32>
    %398 = arith.mulf %395, %395 : vector<8x128xf32>
    %399 = arith.addf %381, %398 : vector<8x128xf32>
    %c20 = arith.constant 20 : index
    %400 = arith.index_cast %20 : i32 to index
    %c0_123 = arith.constant 0 : index
    %401 = vector.load %arg3[%c20, %400, %c0_123] : memref<30x8x128xf32, #tpu.memory_space<vmem>>, vector<1x8x128xf32>
    %402 = vector.shape_cast %401 : vector<1x8x128xf32> to vector<8x128xf32>
    %c20_124 = arith.constant 20 : index
    %403 = arith.index_cast %20 : i32 to index
    %c0_125 = arith.constant 0 : index
    %404 = vector.load %arg2[%c20_124, %403, %c0_125] : memref<30x8x128xf32, #tpu.memory_space<vmem>>, vector<1x8x128xf32>
    %405 = vector.shape_cast %404 : vector<1x8x128xf32> to vector<8x128xf32>
    %406 = arith.subf %402, %405 : vector<8x128xf32>
    %c21 = arith.constant 21 : index
    %407 = arith.index_cast %20 : i32 to index
    %c0_126 = arith.constant 0 : index
    %408 = vector.load %arg3[%c21, %407, %c0_126] : memref<30x8x128xf32, #tpu.memory_space<vmem>>, vector<1x8x128xf32>
    %409 = vector.shape_cast %408 : vector<1x8x128xf32> to vector<8x128xf32>
    %c21_127 = arith.constant 21 : index
    %410 = arith.index_cast %20 : i32 to index
    %c0_128 = arith.constant 0 : index
    %411 = vector.load %arg2[%c21_127, %410, %c0_128] : memref<30x8x128xf32, #tpu.memory_space<vmem>>, vector<1x8x128xf32>
    %412 = vector.shape_cast %411 : vector<1x8x128xf32> to vector<8x128xf32>
    %413 = arith.subf %409, %412 : vector<8x128xf32>
    %414 = arith.mulf %406, %406 : vector<8x128xf32>
    %415 = arith.addf %397, %414 : vector<8x128xf32>
    %416 = arith.mulf %413, %413 : vector<8x128xf32>
    %417 = arith.addf %399, %416 : vector<8x128xf32>
    %c22 = arith.constant 22 : index
    %418 = arith.index_cast %20 : i32 to index
    %c0_129 = arith.constant 0 : index
    %419 = vector.load %arg3[%c22, %418, %c0_129] : memref<30x8x128xf32, #tpu.memory_space<vmem>>, vector<1x8x128xf32>
    %420 = vector.shape_cast %419 : vector<1x8x128xf32> to vector<8x128xf32>
    %c22_130 = arith.constant 22 : index
    %421 = arith.index_cast %20 : i32 to index
    %c0_131 = arith.constant 0 : index
    %422 = vector.load %arg2[%c22_130, %421, %c0_131] : memref<30x8x128xf32, #tpu.memory_space<vmem>>, vector<1x8x128xf32>
    %423 = vector.shape_cast %422 : vector<1x8x128xf32> to vector<8x128xf32>
    %424 = arith.subf %420, %423 : vector<8x128xf32>
    %c23 = arith.constant 23 : index
    %425 = arith.index_cast %20 : i32 to index
    %c0_132 = arith.constant 0 : index
    %426 = vector.load %arg3[%c23, %425, %c0_132] : memref<30x8x128xf32, #tpu.memory_space<vmem>>, vector<1x8x128xf32>
    %427 = vector.shape_cast %426 : vector<1x8x128xf32> to vector<8x128xf32>
    %c23_133 = arith.constant 23 : index
    %428 = arith.index_cast %20 : i32 to index
    %c0_134 = arith.constant 0 : index
    %429 = vector.load %arg2[%c23_133, %428, %c0_134] : memref<30x8x128xf32, #tpu.memory_space<vmem>>, vector<1x8x128xf32>
    %430 = vector.shape_cast %429 : vector<1x8x128xf32> to vector<8x128xf32>
    %431 = arith.subf %427, %430 : vector<8x128xf32>
    %432 = arith.mulf %424, %424 : vector<8x128xf32>
    %433 = arith.addf %415, %432 : vector<8x128xf32>
    %434 = arith.mulf %431, %431 : vector<8x128xf32>
    %435 = arith.addf %417, %434 : vector<8x128xf32>
    %c24 = arith.constant 24 : index
    %436 = arith.index_cast %20 : i32 to index
    %c0_135 = arith.constant 0 : index
    %437 = vector.load %arg3[%c24, %436, %c0_135] : memref<30x8x128xf32, #tpu.memory_space<vmem>>, vector<1x8x128xf32>
    %438 = vector.shape_cast %437 : vector<1x8x128xf32> to vector<8x128xf32>
    %c24_136 = arith.constant 24 : index
    %439 = arith.index_cast %20 : i32 to index
    %c0_137 = arith.constant 0 : index
    %440 = vector.load %arg2[%c24_136, %439, %c0_137] : memref<30x8x128xf32, #tpu.memory_space<vmem>>, vector<1x8x128xf32>
    %441 = vector.shape_cast %440 : vector<1x8x128xf32> to vector<8x128xf32>
    %442 = arith.subf %438, %441 : vector<8x128xf32>
    %c25 = arith.constant 25 : index
    %443 = arith.index_cast %20 : i32 to index
    %c0_138 = arith.constant 0 : index
    %444 = vector.load %arg3[%c25, %443, %c0_138] : memref<30x8x128xf32, #tpu.memory_space<vmem>>, vector<1x8x128xf32>
    %445 = vector.shape_cast %444 : vector<1x8x128xf32> to vector<8x128xf32>
    %c25_139 = arith.constant 25 : index
    %446 = arith.index_cast %20 : i32 to index
    %c0_140 = arith.constant 0 : index
    %447 = vector.load %arg2[%c25_139, %446, %c0_140] : memref<30x8x128xf32, #tpu.memory_space<vmem>>, vector<1x8x128xf32>
    %448 = vector.shape_cast %447 : vector<1x8x128xf32> to vector<8x128xf32>
    %449 = arith.subf %445, %448 : vector<8x128xf32>
    %450 = arith.mulf %442, %442 : vector<8x128xf32>
    %451 = arith.addf %433, %450 : vector<8x128xf32>
    %452 = arith.mulf %449, %449 : vector<8x128xf32>
    %453 = arith.addf %435, %452 : vector<8x128xf32>
    %c26 = arith.constant 26 : index
    %454 = arith.index_cast %20 : i32 to index
    %c0_141 = arith.constant 0 : index
    %455 = vector.load %arg3[%c26, %454, %c0_141] : memref<30x8x128xf32, #tpu.memory_space<vmem>>, vector<1x8x128xf32>
    %456 = vector.shape_cast %455 : vector<1x8x128xf32> to vector<8x128xf32>
    %c26_142 = arith.constant 26 : index
    %457 = arith.index_cast %20 : i32 to index
    %c0_143 = arith.constant 0 : index
    %458 = vector.load %arg2[%c26_142, %457, %c0_143] : memref<30x8x128xf32, #tpu.memory_space<vmem>>, vector<1x8x128xf32>
    %459 = vector.shape_cast %458 : vector<1x8x128xf32> to vector<8x128xf32>
    %460 = arith.subf %456, %459 : vector<8x128xf32>
    %c27 = arith.constant 27 : index
    %461 = arith.index_cast %20 : i32 to index
    %c0_144 = arith.constant 0 : index
    %462 = vector.load %arg3[%c27, %461, %c0_144] : memref<30x8x128xf32, #tpu.memory_space<vmem>>, vector<1x8x128xf32>
    %463 = vector.shape_cast %462 : vector<1x8x128xf32> to vector<8x128xf32>
    %c27_145 = arith.constant 27 : index
    %464 = arith.index_cast %20 : i32 to index
    %c0_146 = arith.constant 0 : index
    %465 = vector.load %arg2[%c27_145, %464, %c0_146] : memref<30x8x128xf32, #tpu.memory_space<vmem>>, vector<1x8x128xf32>
    %466 = vector.shape_cast %465 : vector<1x8x128xf32> to vector<8x128xf32>
    %467 = arith.subf %463, %466 : vector<8x128xf32>
    %468 = arith.mulf %460, %460 : vector<8x128xf32>
    %469 = arith.addf %451, %468 : vector<8x128xf32>
    %470 = arith.mulf %467, %467 : vector<8x128xf32>
    %471 = arith.addf %453, %470 : vector<8x128xf32>
    %c28 = arith.constant 28 : index
    %472 = arith.index_cast %20 : i32 to index
    %c0_147 = arith.constant 0 : index
    %473 = vector.load %arg3[%c28, %472, %c0_147] : memref<30x8x128xf32, #tpu.memory_space<vmem>>, vector<1x8x128xf32>
    %474 = vector.shape_cast %473 : vector<1x8x128xf32> to vector<8x128xf32>
    %c28_148 = arith.constant 28 : index
    %475 = arith.index_cast %20 : i32 to index
    %c0_149 = arith.constant 0 : index
    %476 = vector.load %arg2[%c28_148, %475, %c0_149] : memref<30x8x128xf32, #tpu.memory_space<vmem>>, vector<1x8x128xf32>
    %477 = vector.shape_cast %476 : vector<1x8x128xf32> to vector<8x128xf32>
    %478 = arith.subf %474, %477 : vector<8x128xf32>
    %c29 = arith.constant 29 : index
    %479 = arith.index_cast %20 : i32 to index
    %c0_150 = arith.constant 0 : index
    %480 = vector.load %arg3[%c29, %479, %c0_150] : memref<30x8x128xf32, #tpu.memory_space<vmem>>, vector<1x8x128xf32>
    %481 = vector.shape_cast %480 : vector<1x8x128xf32> to vector<8x128xf32>
    %c29_151 = arith.constant 29 : index
    %482 = arith.index_cast %20 : i32 to index
    %c0_152 = arith.constant 0 : index
    %483 = vector.load %arg2[%c29_151, %482, %c0_152] : memref<30x8x128xf32, #tpu.memory_space<vmem>>, vector<1x8x128xf32>
    %484 = vector.shape_cast %483 : vector<1x8x128xf32> to vector<8x128xf32>
    %485 = arith.subf %481, %484 : vector<8x128xf32>
    %486 = arith.mulf %478, %478 : vector<8x128xf32>
    %487 = arith.addf %469, %486 : vector<8x128xf32>
    %488 = arith.mulf %485, %485 : vector<8x128xf32>
    %489 = arith.addf %471, %488 : vector<8x128xf32>
    %490 = arith.addf %487, %489 : vector<8x128xf32>
    %cst_153 = arith.constant 5.000000e-02 : f32
    %491 = vector.broadcast %cst_153 : f32 to vector<8x128xf32>
    %492 = arith.mulf %490, %491 : vector<8x128xf32>
    %493 = arith.mulf %255, %307 : vector<8x128xf32>
    %494 = arith.addf %18, %493 : vector<8x128xf32>
    %495 = arith.mulf %253, %299 : vector<8x128xf32>
    %496 = arith.addf %18, %495 : vector<8x128xf32>
    %497 = arith.mulf %253, %301 : vector<8x128xf32>
    %498 = arith.addf %18, %497 : vector<8x128xf32>
    %499 = arith.mulf %253, %492 : vector<8x128xf32>
    %500 = arith.addf %18, %499 : vector<8x128xf32>
    %501 = arith.mulf %253, %302 : vector<8x128xf32>
    %502 = arith.addf %18, %501 : vector<8x128xf32>
    %503 = arith.mulf %253, %262 : vector<8x128xf32>
    %504 = arith.addf %18, %503 : vector<8x128xf32>
    %505 = arith.addf %18, %253 : vector<8x128xf32>
    %cst_154 = arith.constant 8.000000e+00 : f32
    %506 = vector.broadcast %cst_154 : f32 to vector<8x128xf32>
    %507 = arith.addf %11, %506 : vector<8x128xf32>
    %cst_155 = arith.constant 8.000000e+00 : f32
    %508 = vector.broadcast %cst_155 : f32 to vector<8x128xf32>
    %509 = arith.addf %17, %508 : vector<8x128xf32>
    %cst_156 = arith.constant 4.900000e+01 : f32
    %510 = vector.broadcast %cst_156 : f32 to vector<8x128xf32>
    %511 = arith.cmpf oge, %509, %510 : vector<8x128xf32>
    %cst_157 = arith.constant 4.900000e+01 : f32
    %512 = vector.broadcast %cst_157 : f32 to vector<8x128xf32>
    %513 = arith.subf %509, %512 : vector<8x128xf32>
    %514 = arith.select %511, %513, %509 : vector<8x128xi1>, vector<8x128xf32>
    %c1_i32_158 = arith.constant 1 : i32
    %c0_159 = arith.constant 0 : index
    %c0_160 = arith.constant 0 : index
    %c0_161 = arith.constant 0 : index
    %c0_162 = arith.constant 0 : index
    %515 = vector.load %arg4[%c0_159, %c0_160, %c0_161, %c0_162] : memref<1x7x8x128xf32, #tpu.memory_space<vmem>>, vector<1x1x8x128xf32>
    %516 = vector.shape_cast %515 : vector<1x1x8x128xf32> to vector<8x128xf32>
    %517 = arith.addf %516, %494 : vector<8x128xf32>
    %c0_163 = arith.constant 0 : index
    %c0_164 = arith.constant 0 : index
    %c0_165 = arith.constant 0 : index
    %c0_166 = arith.constant 0 : index
    %518 = vector.load %arg4[%c0_163, %c0_164, %c0_165, %c0_166] : memref<1x7x8x128xf32, #tpu.memory_space<vmem>>, vector<1x1x8x128xf32>
    %519 = vector.shape_cast %518 : vector<1x1x8x128xf32> to vector<8x128xf32>
    %520 = vector.shape_cast %517 : vector<8x128xf32> to vector<1x1x8x128xf32>
    tpu.vector_store %arg4[%c0_163, %c0_164, %c0_165, %c0_166], %520 {strides = array<i32>} : memref<1x7x8x128xf32, #tpu.memory_space<vmem>>, vector<1x1x8x128xf32>,
    %c0_167 = arith.constant 0 : index
    %c1_168 = arith.constant 1 : index
    %c0_169 = arith.constant 0 : index
    %c0_170 = arith.constant 0 : index
    %521 = vector.load %arg4[%c0_167, %c1_168, %c0_169, %c0_170] : memref<1x7x8x128xf32, #tpu.memory_space<vmem>>, vector<1x1x8x128xf32>
    %522 = vector.shape_cast %521 : vector<1x1x8x128xf32> to vector<8x128xf32>
    %523 = arith.addf %522, %496 : vector<8x128xf32>
    %c0_171 = arith.constant 0 : index
    %c1_172 = arith.constant 1 : index
    %c0_173 = arith.constant 0 : index
    %c0_174 = arith.constant 0 : index
    %524 = vector.load %arg4[%c0_171, %c1_172, %c0_173, %c0_174] : memref<1x7x8x128xf32, #tpu.memory_space<vmem>>, vector<1x1x8x128xf32>
    %525 = vector.shape_cast %524 : vector<1x1x8x128xf32> to vector<8x128xf32>
    %526 = vector.shape_cast %523 : vector<8x128xf32> to vector<1x1x8x128xf32>
    tpu.vector_store %arg4[%c0_171, %c1_172, %c0_173, %c0_174], %526 {strides = array<i32>} : memref<1x7x8x128xf32, #tpu.memory_space<vmem>>, vector<1x1x8x128xf32>,
    %c0_175 = arith.constant 0 : index
    %c2_176 = arith.constant 2 : index
    %c0_177 = arith.constant 0 : index
    %c0_178 = arith.constant 0 : index
    %527 = vector.load %arg4[%c0_175, %c2_176, %c0_177, %c0_178] : memref<1x7x8x128xf32, #tpu.memory_space<vmem>>, vector<1x1x8x128xf32>
    %528 = vector.shape_cast %527 : vector<1x1x8x128xf32> to vector<8x128xf32>
    %529 = arith.addf %528, %498 : vector<8x128xf32>
    %c0_179 = arith.constant 0 : index
    %c2_180 = arith.constant 2 : index
    %c0_181 = arith.constant 0 : index
    %c0_182 = arith.constant 0 : index
    %530 = vector.load %arg4[%c0_179, %c2_180, %c0_181, %c0_182] : memref<1x7x8x128xf32, #tpu.memory_space<vmem>>, vector<1x1x8x128xf32>
    %531 = vector.shape_cast %530 : vector<1x1x8x128xf32> to vector<8x128xf32>
    %532 = vector.shape_cast %529 : vector<8x128xf32> to vector<1x1x8x128xf32>
    tpu.vector_store %arg4[%c0_179, %c2_180, %c0_181, %c0_182], %532 {strides = array<i32>} : memref<1x7x8x128xf32, #tpu.memory_space<vmem>>, vector<1x1x8x128xf32>,
    %c0_183 = arith.constant 0 : index
    %c3_184 = arith.constant 3 : index
    %c0_185 = arith.constant 0 : index
    %c0_186 = arith.constant 0 : index
    %533 = vector.load %arg4[%c0_183, %c3_184, %c0_185, %c0_186] : memref<1x7x8x128xf32, #tpu.memory_space<vmem>>, vector<1x1x8x128xf32>
    %534 = vector.shape_cast %533 : vector<1x1x8x128xf32> to vector<8x128xf32>
    %535 = arith.addf %534, %500 : vector<8x128xf32>
    %c0_187 = arith.constant 0 : index
    %c3_188 = arith.constant 3 : index
    %c0_189 = arith.constant 0 : index
    %c0_190 = arith.constant 0 : index
    %536 = vector.load %arg4[%c0_187, %c3_188, %c0_189, %c0_190] : memref<1x7x8x128xf32, #tpu.memory_space<vmem>>, vector<1x1x8x128xf32>
    %537 = vector.shape_cast %536 : vector<1x1x8x128xf32> to vector<8x128xf32>
    %538 = vector.shape_cast %535 : vector<8x128xf32> to vector<1x1x8x128xf32>
    tpu.vector_store %arg4[%c0_187, %c3_188, %c0_189, %c0_190], %538 {strides = array<i32>} : memref<1x7x8x128xf32, #tpu.memory_space<vmem>>, vector<1x1x8x128xf32>,
    %c0_191 = arith.constant 0 : index
    %c4_192 = arith.constant 4 : index
    %c0_193 = arith.constant 0 : index
    %c0_194 = arith.constant 0 : index
    %539 = vector.load %arg4[%c0_191, %c4_192, %c0_193, %c0_194] : memref<1x7x8x128xf32, #tpu.memory_space<vmem>>, vector<1x1x8x128xf32>
    %540 = vector.shape_cast %539 : vector<1x1x8x128xf32> to vector<8x128xf32>
    %541 = arith.addf %540, %502 : vector<8x128xf32>
    %c0_195 = arith.constant 0 : index
    %c4_196 = arith.constant 4 : index
    %c0_197 = arith.constant 0 : index
    %c0_198 = arith.constant 0 : index
    %542 = vector.load %arg4[%c0_195, %c4_196, %c0_197, %c0_198] : memref<1x7x8x128xf32, #tpu.memory_space<vmem>>, vector<1x1x8x128xf32>
    %543 = vector.shape_cast %542 : vector<1x1x8x128xf32> to vector<8x128xf32>
    %544 = vector.shape_cast %541 : vector<8x128xf32> to vector<1x1x8x128xf32>
    tpu.vector_store %arg4[%c0_195, %c4_196, %c0_197, %c0_198], %544 {strides = array<i32>} : memref<1x7x8x128xf32, #tpu.memory_space<vmem>>, vector<1x1x8x128xf32>,
    %c0_199 = arith.constant 0 : index
    %c5_200 = arith.constant 5 : index
    %c0_201 = arith.constant 0 : index
    %c0_202 = arith.constant 0 : index
    %545 = vector.load %arg4[%c0_199, %c5_200, %c0_201, %c0_202] : memref<1x7x8x128xf32, #tpu.memory_space<vmem>>, vector<1x1x8x128xf32>
    %546 = vector.shape_cast %545 : vector<1x1x8x128xf32> to vector<8x128xf32>
    %547 = arith.addf %546, %504 : vector<8x128xf32>
    %c0_203 = arith.constant 0 : index
    %c5_204 = arith.constant 5 : index
    %c0_205 = arith.constant 0 : index
    %c0_206 = arith.constant 0 : index
    %548 = vector.load %arg4[%c0_203, %c5_204, %c0_205, %c0_206] : memref<1x7x8x128xf32, #tpu.memory_space<vmem>>, vector<1x1x8x128xf32>
    %549 = vector.shape_cast %548 : vector<1x1x8x128xf32> to vector<8x128xf32>
    %550 = vector.shape_cast %547 : vector<8x128xf32> to vector<1x1x8x128xf32>
    tpu.vector_store %arg4[%c0_203, %c5_204, %c0_205, %c0_206], %550 {strides = array<i32>} : memref<1x7x8x128xf32, #tpu.memory_space<vmem>>, vector<1x1x8x128xf32>,
    %c0_207 = arith.constant 0 : index
    %c6_208 = arith.constant 6 : index
    %c0_209 = arith.constant 0 : index
    %c0_210 = arith.constant 0 : index
    %551 = vector.load %arg4[%c0_207, %c6_208, %c0_209, %c0_210] : memref<1x7x8x128xf32, #tpu.memory_space<vmem>>, vector<1x1x8x128xf32>
    %552 = vector.shape_cast %551 : vector<1x1x8x128xf32> to vector<8x128xf32>
    %553 = arith.addf %552, %505 : vector<8x128xf32>
    %c0_211 = arith.constant 0 : index
    %c6_212 = arith.constant 6 : index
    %c0_213 = arith.constant 0 : index
    %c0_214 = arith.constant 0 : index
    %554 = vector.load %arg4[%c0_211, %c6_212, %c0_213, %c0_214] : memref<1x7x8x128xf32, #tpu.memory_space<vmem>>, vector<1x1x8x128xf32>
    %555 = vector.shape_cast %554 : vector<1x1x8x128xf32> to vector<8x128xf32>
    %556 = vector.shape_cast %553 : vector<8x128xf32> to vector<1x1x8x128xf32>
    tpu.vector_store %arg4[%c0_211, %c6_212, %c0_213, %c0_214], %556 {strides = array<i32>} : memref<1x7x8x128xf32, #tpu.memory_space<vmem>>, vector<1x1x8x128xf32>,
    return
  }
  func.func @transform_0(%arg0: i32, %arg1: i32) -> (i32, i32, i32) {
    %c1_i32 = arith.constant 1 : i32
    %0 = arith.muli %arg0, %c1_i32 : i32
    %1 = arith.addi %0, %arg1 : i32
    %c0_i32 = arith.constant 0 : i32
    %c0_i32_0 = arith.constant 0 : i32
    %c0_i32_1 = arith.constant 0 : i32
    return %c0_i32, %1, %c0_i32_0 : i32, i32, i32
  }
  func.func @transform_1(%arg0: i32, %arg1: i32) -> (i32, i32, i32) {
    %c1_i32 = arith.constant 1 : i32
    %0 = arith.muli %arg0, %c1_i32 : i32
    %1 = arith.addi %0, %arg1 : i32
    %c0_i32 = arith.constant 0 : i32
    %c0_i32_0 = arith.constant 0 : i32
    %c0_i32_1 = arith.constant 0 : i32
    return %c0_i32, %1, %c0_i32_0 : i32, i32, i32
  }
  func.func @transform_2(%arg0: i32, %arg1: i32) -> (i32, i32, i32, i32) {
    %c0_i32 = arith.constant 0 : i32
    %c0_i32_0 = arith.constant 0 : i32
    %c0_i32_1 = arith.constant 0 : i32
    %c0_i32_2 = arith.constant 0 : i32
    return %arg0, %c0_i32, %c0_i32_0, %c0_i32_1 : i32, i32, i32, i32
  }
}

</mosaic_0001>

<llo_original>
// kernel: yolo_loss.1
$region0: #{yolo_loss.1}
  #allocation0 [shape = 'u32[]', space=smem, size = 0x4, offset = 0x4, fixed_abs, tag = 'smem constant byte address 0x4 - core index']
  #allocation1 [shape = 'u32[144,128]{1,0:T(1,128)}', space=vmem, size = 0x12000, scoped, tag = 'internal scratch']
  %s0 = inlined_call_operand.vmem [shape: f32[30,8,128], index: 0, kind: input, shape index: {}]
  %s1 = inlined_call_operand.vmem [shape: f32[30,8,128], index: 1, kind: input, shape index: {}]
  %s2 = inlined_call_operand.vmem [shape: f32[1,7,8,128], index: 2, kind: output, shape index: {}]
  %s3 = sld [smem:[#allocation0]]
  $region22: #{yolo_loss.1} parent=0
    _
  %s5 = ssub.s32 1, %s3
  %s6 = scalar_select 0, %s5, %s3
  // Predicated region
  $region2: #{yolo_loss.1} parent=0 // pred_check
    _
  $region3: #{yolo_loss.1} parent=0 // pred_check_branch
    %8 = sbr.rel (0) target = $region5
  $region4: #{yolo_loss.1} parent=0 // pred_region
    %s9 = sadd.s32 0, 0
    %p10 = scmp.lt.s32.totalorder %s9, 0
    %s11 = scalar_select %p10, %s9, 0
    %s12 = smul.addr %s11, 8
    %s13 = scalar_lea.vmem %s0, %s12
    %s14 = sadd.s32 0, 0
  $region5: #{yolo_loss.1} parent=0 // pred_fallthru
    _
  // Predicated region
  $region6: #{yolo_loss.1} parent=0 // pred_check
    _
  $region7: #{yolo_loss.1} parent=0 // pred_check_branch
    %16 = sbr.rel (0) target = $region9
  $region8: #{yolo_loss.1} parent=0 // pred_region
    %s17 = sadd.s32 0, 0
    %p18 = scmp.lt.s32.totalorder %s17, 0
    %s19 = scalar_select %p18, %s17, 0
    %s20 = smul.addr %s19, 8
    %s21 = scalar_lea.vmem %s1, %s20
    %s22 = sadd.s32 0, 0
  $region9: #{yolo_loss.1} parent=0 // pred_fallthru
    _
  %s23 = sadd.s32 0, 0
  %p24 = scmp.lt.s32.totalorder %s23, 0
  %s25 = scalar_select %p24, %s23, 0
  %s26 = smul.addr %s25, 8
  %s27 = scalar_lea.vmem %s0, %s26
  %s28 = sadd.s32 0, 0
  %p29 = scmp.lt.s32.totalorder %s28, 0
  %s30 = scalar_select %p29, %s28, 0
  %s31 = smul.addr %s30, 8
  %s32 = scalar_lea.vmem %s1, %s31
  %s33 = sadd.s32 0, 0
  %p34 = scmp.lt.s32.totalorder %s33, 0
  %s35 = scalar_select %p34, %s33, 0
  %s36 = smul.addr %s35, 8
  %s37 = scalar_lea.vmem %s0, %s36
  %s38 = sadd.s32 0, 0
  %s39 = sadd.s32 0, 0
  %p40 = scmp.lt.s32.totalorder %s39, 0
  %s41 = scalar_select %p40, %s39, 0
  %s42 = smul.addr %s41, 8
  %s43 = scalar_lea.vmem %s1, %s42
  %s44 = sadd.s32 0, 0
  %p45 = scmp.eq.s32.totalorder 0, 0
  // Predicated region
  $region10: #{yolo_loss.1} parent=0 // pred_check
    %p46 = pneg %p45
  $region11: #{yolo_loss.1} parent=0 // pred_check_branch
    %48 = sbr.rel (%p46) target = $region13
  $region12: #{yolo_loss.1} parent=0 // pred_region
    %49 = vst [vmem:[%s2] sm:$0xff] 0.0
    %50 = vst [vmem:[%s2 + $0x8] sm:$0xff] 0.0
    %51 = vst [vmem:[%s2 + $0x10] sm:$0xff] 0.0
    %52 = vst [vmem:[%s2 + $0x18] sm:$0xff] 0.0
    %53 = vst [vmem:[%s2 + $0x20] sm:$0xff] 0.0
    %54 = vst [vmem:[%s2 + $0x28] sm:$0xff] 0.0
    %55 = vst [vmem:[%s2 + $0x30] sm:$0xff] 0.0
  $region13: #{yolo_loss.1} parent=0 // pred_fallthru
    _
  %s56 = sadd.s32 0, 0
  %s57 = smul.u32 %s56, 8
  %v58 = vlaneseq
  %v59 = vshrl.u32 %v58, 7
  %v60 = vlaneseq
  %v61 = vand.u32 %v60, 127
  %v62 = vcvt.s32.f32 %v61
  %v63 = vstv %s57
  %v64 = vadd.s32 %v59, %v63
  %v65 = vcvt.s32.f32 %v64
  %v66 = vrcp.pop 49.0
  %v67 = vmul.f32 %v65, %v66
  %v68 = vfloor.f32 %v67
  %v69 = vmul.f32 %v68, 49.0
  %v70 = vsub.f32 %v65, %v69
  %vm71 = vcmp.lt.f32.partialorder %v65, 0.0
  %vm72 = vcmp.eq.f32.partialorder %v65, 0.0
  %vm73 = vcmp.lt.f32.partialorder %v62, 98.0
  %vm74 = vmand %vm72, %vm73
  %vm75 = vmor %vm71, %vm74
  %v76 = vmul.f32 %v70, 128.0
  %v77 = vadd.f32 %v76, %v62
  %v78 = vmul.f32 %v77, 0.020408163
  %v79 = vadd.f32 %v78, 0.001
  %v80 = vfloor.f32 %v79
  %v81 = vmul.f32 %v80, 49.0
  %v82 = vsub.f32 %v77, %v81
  %v83 = vmul.f32 %v82, 0.14285715
  %v84 = vadd.f32 %v83, 0.001
  %v85 = vfloor.f32 %v84
  %v86 = vmul.f32 %v85, 7.0
  %v87 = vsub.f32 %v82, %v86
  %v88 = vmul.f32 %v87, 64.0
  %v89 = vmul.f32 %v85, 64.0
  %s90 = sadd.s32 0, 40
  %s91 = scalar_lea.vmem %s43, %s90
  %v92 = vld [vmem:[%s91] sm:$0xff]
  %s93 = sadd.s32 0, 48
  %s94 = scalar_lea.vmem %s43, %s93
  %v95 = vld [vmem:[%s94] sm:$0xff]
  %s96 = sadd.s32 0, 56
  %s97 = scalar_lea.vmem %s43, %s96
  %v98 = vld [vmem:[%s97] sm:$0xff]
  %s99 = sadd.s32 0, 64
  %s100 = scalar_lea.vmem %s43, %s99
  %v101 = vld [vmem:[%s100] sm:$0xff]
  %v102 = vsub.f32 %v98, %v92
  %v103 = vsub.f32 %v101, %v95
  %v104 = vmul.f32 %v102, %v103
  %v105 = vld [vmem:[%s37] sm:$0xff]
  %s106 = sadd.s32 0, 8
  %s107 = scalar_lea.vmem %s37, %s106
  %v108 = vld [vmem:[%s107] sm:$0xff]
  %s109 = sadd.s32 0, 16
  %s110 = scalar_lea.vmem %s37, %s109
  %v111 = vld [vmem:[%s110] sm:$0xff]
  %s112 = sadd.s32 0, 24
  %s113 = scalar_lea.vmem %s37, %s112
  %v114 = vld [vmem:[%s113] sm:$0xff]
  %s115 = sadd.s32 0, 32
  %s116 = scalar_lea.vmem %s37, %s115
  %v117 = vld [vmem:[%s116] sm:$0xff]
  %s118 = scalar_lea.vmem %s37, %s90
  %v119 = vld [vmem:[%s118] sm:$0xff]
  %s120 = scalar_lea.vmem %s37, %s93
  %v121 = vld [vmem:[%s120] sm:$0xff]
  %s122 = scalar_lea.vmem %s37, %s96
  %v123 = vld [vmem:[%s122] sm:$0xff]
  %s124 = scalar_lea.vmem %s37, %s99
  %v125 = vld [vmem:[%s124] sm:$0xff]
  %s126 = sadd.s32 0, 72
  %s127 = scalar_lea.vmem %s37, %s126
  %v128 = vld [vmem:[%s127] sm:$0xff]
  %v129 = vmul.f32 %v105, 64.0
  %v130 = vadd.f32 %v88, %v129
  %vm131 = vcmp.lt.f32.partialorder %v130, 0.0
  %v132 = vceil.f32 %v130
  %v133 = vfloor.f32 %v130
  %v134 = vsel %vm131, %v132, %v133
  %v135 = vmul.f32 %v108, 64.0
  %v136 = vadd.f32 %v89, %v135
  %vm137 = vcmp.lt.f32.partialorder %v136, 0.0
  %v138 = vceil.f32 %v136
  %v139 = vfloor.f32 %v136
  %v140 = vsel %vm137, %v138, %v139
  %v141 = vmul.f32 %v111, 448.0
  %vm142 = vcmp.lt.f32.partialorder %v141, 0.0
  %v143 = vceil.f32 %v141
  %v144 = vfloor.f32 %v141
  %v145 = vsel %vm142, %v143, %v144
  %v146 = vmul.f32 %v114, 448.0
  %vm147 = vcmp.lt.f32.partialorder %v146, 0.0
  %v148 = vceil.f32 %v146
  %v149 = vfloor.f32 %v146
  %v150 = vsel %vm147, %v148, %v149
  %v151 = vmul.f32 %v145, 0.5
  %v152 = vsub.f32 %v134, %v151
  %v153 = vmax.f32 %v152, 0.0
  %v154 = vmul.f32 %v150, 0.5
  %v155 = vsub.f32 %v140, %v154
  %v156 = vmax.f32 %v155, 0.0
  %v157 = vadd.f32 %v134, %v151
  %v158 = vmin.f32 %v157, 447.0
  %v159 = vadd.f32 %v140, %v154
  %v160 = vmin.f32 %v159, 447.0
  %v161 = vsub.f32 %v158, %v153
  %v162 = vsub.f32 %v160, %v156
  %v163 = vmul.f32 %v161, %v162
  %v164 = vmax.f32 %v153, %v92
  %v165 = vmin.f32 %v158, %v98
  %v166 = vmax.f32 %v156, %v95
  %v167 = vmin.f32 %v160, %v101
  %v168 = vsub.f32 %v165, %v164
  %v169 = vsub.f32 %v167, %v166
  %v170 = vmul.f32 %v168, %v169
  %v171 = vadd.f32 %v163, %v104
  %v172 = vsub.f32 %v171, %v170
  %vm173 = vcmp.eq.f32.partialorder %v172, 0.0
  %v174 = vsel %vm173, 1.0, %v172
  %vm175 = vcmp.lt.f32.partialorder %v165, %v164
  %vm176 = vcmp.lt.f32.partialorder %v167, %v166
  %vm177 = vmor %vm175, %vm176
  %v178 = vrcp.pop %v174
  %v179 = vmul.f32 %v170, %v178
  %v180 = vsel %vm177, 0.0, %v179
  %v181 = vmul.f32 %v119, 64.0
  %v182 = vadd.f32 %v88, %v181
  %vm183 = vcmp.lt.f32.partialorder %v182, 0.0
  %v184 = vceil.f32 %v182
  %v185 = vfloor.f32 %v182
  %v186 = vsel %vm183, %v184, %v185
  %v187 = vmul.f32 %v121, 64.0
  %v188 = vadd.f32 %v89, %v187
  %vm189 = vcmp.lt.f32.partialorder %v188, 0.0
  %v190 = vceil.f32 %v188
  %v191 = vfloor.f32 %v188
  %v192 = vsel %vm189, %v190, %v191
  %v193 = vmul.f32 %v123, 448.0
  %vm194 = vcmp.lt.f32.partialorder %v193, 0.0
  %v195 = vceil.f32 %v193
  %v196 = vfloor.f32 %v193
  %v197 = vsel %vm194, %v195, %v196
  %v198 = vmul.f32 %v125, 448.0
  %vm199 = vcmp.lt.f32.partialorder %v198, 0.0
  %v200 = vceil.f32 %v198
  %v201 = vfloor.f32 %v198
  %v202 = vsel %vm199, %v200, %v201
  %v203 = vmul.f32 %v197, 0.5
  %v204 = vsub.f32 %v186, %v203
  %v205 = vmax.f32 %v204, 0.0
  %v206 = vmul.f32 %v202, 0.5
  %v207 = vsub.f32 %v192, %v206
  %v208 = vmax.f32 %v207, 0.0
  %v209 = vadd.f32 %v186, %v203
  %v210 = vmin.f32 %v209, 447.0
  %v211 = vadd.f32 %v192, %v206
  %v212 = vmin.f32 %v211, 447.0
  %v213 = vsub.f32 %v210, %v205
  %v214 = vsub.f32 %v212, %v208
  %v215 = vmul.f32 %v213, %v214
  %v216 = vmax.f32 %v205, %v92
  %v217 = vmin.f32 %v210, %v98
  %v218 = vmax.f32 %v208, %v95
  %v219 = vmin.f32 %v212, %v101
  %v220 = vsub.f32 %v217, %v216
  %v221 = vsub.f32 %v219, %v218
  %v222 = vmul.f32 %v220, %v221
  %v223 = vadd.f32 %v215, %v104
  %v224 = vsub.f32 %v223, %v222
  %vm225 = vcmp.eq.f32.partialorder %v224, 0.0
  %v226 = vsel %vm225, 1.0, %v224
  %vm227 = vcmp.lt.f32.partialorder %v217, %v216
  %vm228 = vcmp.lt.f32.partialorder %v219, %v218
  %vm229 = vmor %vm227, %vm228
  %v230 = vrcp.pop %v226
  %v231 = vmul.f32 %v222, %v230
  %v232 = vsel %vm229, 0.0, %v231
  %vm233 = vcmp.gt.f32.partialorder %v180, %v232
  %s234 = scalar_lea.vmem %s43, %s126
  %v235 = vld [vmem:[%s234] sm:$0xff]
  %v236 = vround.ne.pseudo %v235
  %vm237 = vcmp.ne.f32.partialorder %v236, 0.0
  %vm238 = vmand %vm237, %vm75
  %vm239 = vcmp.eq.f32.partialorder %v236, 0.0
  %vm240 = vmand %vm239, %vm75
  %v241 = vsel %vm238, 1, 0
  %v242 = vcvt.s32.f32 %v241
  %v243 = vsel %vm240, 1, 0
  %v244 = vcvt.s32.f32 %v243
  %v245 = vsel %vm233, %v105, %v119
  %v246 = vsel %vm233, %v108, %v121
  %v247 = vsel %vm233, %v111, %v123
  %v248 = vsel %vm233, %v114, %v125
  %v249 = vsel %vm233, %v117, %v128
  %v250 = vsel %vm233, %v128, %v117
  %v251 = vsel %vm233, %v180, %v232
  %v252 = vld [vmem:[%s43] sm:$0xff]
  %v253 = vsub.f32 %v252, %v245
  %s254 = scalar_lea.vmem %s43, %s106
  %v255 = vld [vmem:[%s254] sm:$0xff]
  %v256 = vsub.f32 %v255, %v246
  %s257 = scalar_lea.vmem %s43, %s109
  %v258 = vld [vmem:[%s257] sm:$0xff]
  %v259 = vadd.f32 %v258, 1e-08
  %v260 = vrsqrt.pop %v259
  %v261 = vmul.f32 %v259, %v260
  %vm262 = vcmp.eq.f32.partialorder %v259, inf
  %v263 = vsel %vm262, %v259, %v261
  %vm264 = vcmp.eq.f32.partialorder %v259, 0.0
  %v265 = vand.u32 %v259, 2147483648
  %v266 = vsel %vm264, %v265, %v263
  %v267 = vadd.f32 %v247, 1e-08
  %v268 = vrsqrt.pop %v267
  %v269 = vmul.f32 %v267, %v268
  %vm270 = vcmp.eq.f32.partialorder %v267, inf
  %v271 = vsel %vm270, %v267, %v269
  %vm272 = vcmp.eq.f32.partialorder %v267, 0.0
  %v273 = vand.u32 %v267, 2147483648
  %v274 = vsel %vm272, %v273, %v271
  %v275 = vsub.f32 %v266, %v274
  %s276 = scalar_lea.vmem %s43, %s112
  %v277 = vld [vmem:[%s276] sm:$0xff]
  %v278 = vadd.f32 %v277, 1e-08
  %v279 = vrsqrt.pop %v278
  %v280 = vmul.f32 %v278, %v279
  %vm281 = vcmp.eq.f32.partialorder %v278, inf
  %v282 = vsel %vm281, %v278, %v280
  %vm283 = vcmp.eq.f32.partialorder %v278, 0.0
  %v284 = vand.u32 %v278, 2147483648
  %v285 = vsel %vm283, %v284, %v282
  %v286 = vadd.f32 %v248, 1e-08
  %v287 = vrsqrt.pop %v286
  %v288 = vmul.f32 %v286, %v287
  %vm289 = vcmp.eq.f32.partialorder %v286, inf
  %v290 = vsel %vm289, %v286, %v288
  %vm291 = vcmp.eq.f32.partialorder %v286, 0.0
  %v292 = vand.u32 %v286, 2147483648
  %v293 = vsel %vm291, %v292, %v290
  %v294 = vsub.f32 %v285, %v293
  %v295 = vmul.f32 %v253, %v253
  %v296 = vmul.f32 %v256, %v256
  %v297 = vadd.f32 %v295, %v296
  %v298 = vmul.f32 %v275, %v275
  %v299 = vadd.f32 %v297, %v298
  %v300 = vmul.f32 %v294, %v294
  %v301 = vadd.f32 %v299, %v300
  %v302 = vmul.f32 %v301, 5.0
  %v303 = vsub.f32 %v249, %v251
  %v304 = vmul.f32 %v303, %v303
  %v305 = vmul.f32 %v250, %v250
  %v306 = vmul.f32 %v117, %v117
  %v307 = vmul.f32 %v306, 0.5
  %v308 = vmul.f32 %v128, %v128
  %v309 = vadd.f32 %v307, %v308
  %s310 = sadd.s32 0, 80
  %s311 = scalar_lea.vmem %s43, %s310
  %v312 = vld [vmem:[%s311] sm:$0xff]
  %s313 = scalar_lea.vmem %s37, %s310
  %v314 = vld [vmem:[%s313] sm:$0xff]
  %v315 = vsub.f32 %v312, %v314
  %s316 = sadd.s32 0, 88
  %s317 = scalar_lea.vmem %s43, %s316
  %v318 = vld [vmem:[%s317] sm:$0xff]
  %s319 = scalar_lea.vmem %s37, %s316
  %v320 = vld [vmem:[%s319] sm:$0xff]
  %v321 = vsub.f32 %v318, %v320
  %v322 = vmul.f32 %v315, %v315
  %v323 = vadd.f32 %v322, 0.0
  %v324 = vmul.f32 %v321, %v321
  %v325 = vadd.f32 %v324, 0.0
  %s326 = sadd.s32 0, 96
  %s327 = scalar_lea.vmem %s43, %s326
  %v328 = vld [vmem:[%s327] sm:$0xff]
  %s329 = scalar_lea.vmem %s37, %s326
  %v330 = vld [vmem:[%s329] sm:$0xff]
  %v331 = vsub.f32 %v328, %v330
  %s332 = sadd.s32 0, 104
  %s333 = scalar_lea.vmem %s43, %s332
  %v334 = vld [vmem:[%s333] sm:$0xff]
  %s335 = scalar_lea.vmem %s37, %s332
  %v336 = vld [vmem:[%s335] sm:$0xff]
  %v337 = vsub.f32 %v334, %v336
  %v338 = vmul.f32 %v331, %v331
  %v339 = vadd.f32 %v323, %v338
  %v340 = vmul.f32 %v337, %v337
  %v341 = vadd.f32 %v325, %v340
  %s342 = sadd.s32 0, 112
  %s343 = scalar_lea.vmem %s43, %s342
  %v344 = vld [vmem:[%s343] sm:$0xff]
  %s345 = scalar_lea.vmem %s37, %s342
  %v346 = vld [vmem:[%s345] sm:$0xff]
  %v347 = vsub.f32 %v344, %v346
  %s348 = sadd.s32 0, 120
  %s349 = scalar_lea.vmem %s43, %s348
  %v350 = vld [vmem:[%s349] sm:$0xff]
  %s351 = scalar_lea.vmem %s37, %s348
  %v352 = vld [vmem:[%s351] sm:$0xff]
  %v353 = vsub.f32 %v350, %v352
  %v354 = vmul.f32 %v347, %v347
  %v355 = vadd.f32 %v339, %v354
  %v356 = vmul.f32 %v353, %v353
  %v357 = vadd.f32 %v341, %v356
  %s358 = sadd.s32 0, 128
  %s359 = scalar_lea.vmem %s43, %s358
  %v360 = vld [vmem:[%s359] sm:$0xff]
  %s361 = scalar_lea.vmem %s37, %s358
  %v362 = vld [vmem:[%s361] sm:$0xff]
  %v363 = vsub.f32 %v360, %v362
  %s364 = sadd.s32 0, 136
  %s365 = scalar_lea.vmem %s43, %s364
  %v366 = vld [vmem:[%s365] sm:$0xff]
  %s367 = scalar_lea.vmem %s37, %s364
  %v368 = vld [vmem:[%s367] sm:$0xff]
  %v369 = vsub.f32 %v366, %v368
  %v370 = vmul.f32 %v363, %v363
  %v371 = vadd.f32 %v355, %v370
  %v372 = vmul.f32 %v369, %v369
  %v373 = vadd.f32 %v357, %v372
  %s374 = sadd.s32 0, 144
  %s375 = scalar_lea.vmem %s43, %s374
  %v376 = vld [vmem:[%s375] sm:$0xff]
  %s377 = scalar_lea.vmem %s37, %s374
  %v378 = vld [vmem:[%s377] sm:$0xff]
  %v379 = vsub.f32 %v376, %v378
  %s380 = sadd.s32 0, 152
  %s381 = scalar_lea.vmem %s43, %s380
  %v382 = vld [vmem:[%s381] sm:$0xff]
  %s383 = scalar_lea.vmem %s37, %s380
  %v384 = vld [vmem:[%s383] sm:$0xff]
  %v385 = vsub.f32 %v382, %v384
  %v386 = vmul.f32 %v379, %v379
  %v387 = vadd.f32 %v371, %v386
  %v388 = vmul.f32 %v385, %v385
  %v389 = vadd.f32 %v373, %v388
  %s390 = sadd.s32 0, 160
  %s391 = scalar_lea.vmem %s43, %s390
  %v392 = vld [vmem:[%s391] sm:$0xff]
  %s393 = scalar_lea.vmem %s37, %s390
  %v394 = vld [vmem:[%s393] sm:$0xff]
  %v395 = vsub.f32 %v392, %v394
  %s396 = sadd.s32 0, 168
  %s397 = scalar_lea.vmem %s43, %s396
  %v398 = vld [vmem:[%s397] sm:$0xff]
  %s399 = scalar_lea.vmem %s37, %s396
  %v400 = vld [vmem:[%s399] sm:$0xff]
  %v401 = vsub.f32 %v398, %v400
  %v402 = vmul.f32 %v395, %v395
  %v403 = vadd.f32 %v387, %v402
  %v404 = vmul.f32 %v401, %v401
  %v405 = vadd.f32 %v389, %v404
  %s406 = sadd.s32 0, 176
  %s407 = scalar_lea.vmem %s43, %s406
  %v408 = vld [vmem:[%s407] sm:$0xff]
  %s409 = scalar_lea.vmem %s37, %s406
  %v410 = vld [vmem:[%s409] sm:$0xff]
  %v411 = vsub.f32 %v408, %v410
  %s412 = sadd.s32 0, 184
  %s413 = scalar_lea.vmem %s43, %s412
  %v414 = vld [vmem:[%s413] sm:$0xff]
  %s415 = scalar_lea.vmem %s37, %s412
  %v416 = vld [vmem:[%s415] sm:$0xff]
  %v417 = vsub.f32 %v414, %v416
  %v418 = vmul.f32 %v411, %v411
  %v419 = vadd.f32 %v403, %v418
  %v420 = vmul.f32 %v417, %v417
  %v421 = vadd.f32 %v405, %v420
  %s422 = sadd.s32 0, 192
  %s423 = scalar_lea.vmem %s43, %s422
  %v424 = vld [vmem:[%s423] sm:$0xff]
  %s425 = scalar_lea.vmem %s37, %s422
  %v426 = vld [vmem:[%s425] sm:$0xff]
  %v427 = vsub.f32 %v424, %v426
  %s428 = sadd.s32 0, 200
  %s429 = scalar_lea.vmem %s43, %s428
  %v430 = vld [vmem:[%s429] sm:$0xff]
  %s431 = scalar_lea.vmem %s37, %s428
  %v432 = vld [vmem:[%s431] sm:$0xff]
  %v433 = vsub.f32 %v430, %v432
  %v434 = vmul.f32 %v427, %v427
  %v435 = vadd.f32 %v419, %v434
  %v436 = vmul.f32 %v433, %v433
  %v437 = vadd.f32 %v421, %v436
  %s438 = sadd.s32 0, 208
  %s439 = scalar_lea.vmem %s43, %s438
  %v440 = vld [vmem:[%s439] sm:$0xff]
  %s441 = scalar_lea.vmem %s37, %s438
  %v442 = vld [vmem:[%s441] sm:$0xff]
  %v443 = vsub.f32 %v440, %v442
  %s444 = sadd.s32 0, 216
  %s445 = scalar_lea.vmem %s43, %s444
  %v446 = vld [vmem:[%s445] sm:$0xff]
  %s447 = scalar_lea.vmem %s37, %s444
  %v448 = vld [vmem:[%s447] sm:$0xff]
  %v449 = vsub.f32 %v446, %v448
  %v450 = vmul.f32 %v443, %v443
  %v451 = vadd.f32 %v435, %v450
  %v452 = vmul.f32 %v449, %v449
  %v453 = vadd.f32 %v437, %v452
  %s454 = sadd.s32 0, 224
  %s455 = scalar_lea.vmem %s43, %s454
  %v456 = vld [vmem:[%s455] sm:$0xff]
  %s457 = scalar_lea.vmem %s37, %s454
  %v458 = vld [vmem:[%s457] sm:$0xff]
  %v459 = vsub.f32 %v456, %v458
  %s460 = sadd.s32 0, 232
  %s461 = scalar_lea.vmem %s43, %s460
  %v462 = vld [vmem:[%s461] sm:$0xff]
  %s463 = scalar_lea.vmem %s37, %s460
  %v464 = vld [vmem:[%s463] sm:$0xff]
  %v465 = vsub.f32 %v462, %v464
  %v466 = vmul.f32 %v459, %v459
  %v467 = vadd.f32 %v451, %v466
  %v468 = vmul.f32 %v465, %v465
  %v469 = vadd.f32 %v453, %v468
  %v470 = vadd.f32 %v467, %v469
  %v471 = vmul.f32 %v470, 0.05
  %v472 = vmul.f32 %v244, %v309
  %v473 = vadd.f32 %v472, 0.0
  %v474 = vmul.f32 %v242, %v302
  %v475 = vadd.f32 %v474, 0.0
  %v476 = vmul.f32 %v242, %v304
  %v477 = vadd.f32 %v476, 0.0
  %v478 = vmul.f32 %v242, %v471
  %v479 = vadd.f32 %v478, 0.0
  %v480 = vmul.f32 %v242, %v305
  %v481 = vadd.f32 %v480, 0.0
  %v482 = vmul.f32 %v242, %v251
  %v483 = vadd.f32 %v482, 0.0
  %v484 = vadd.f32 %v242, 0.0
  %v485 = vld [vmem:[%s2] sm:$0xff]
  %v486 = vadd.f32 %v485, %v473
  %487 = vst [vmem:[%s2] sm:$0xff] %v486
  %s488 = scalar_lea.vmem %s2, 8
  %v489 = vld [vmem:[%s488] sm:$0xff]
  %v490 = vadd.f32 %v489, %v475
  %491 = vst [vmem:[%s488] sm:$0xff] %v490
  %s492 = scalar_lea.vmem %s2, 16
  %v493 = vld [vmem:[%s492] sm:$0xff]
  %v494 = vadd.f32 %v493, %v477
  %495 = vst [vmem:[%s492] sm:$0xff] %v494
  %s496 = scalar_lea.vmem %s2, 24
  %v497 = vld [vmem:[%s496] sm:$0xff]
  %v498 = vadd.f32 %v497, %v479
  %499 = vst [vmem:[%s496] sm:$0xff] %v498
  %s500 = scalar_lea.vmem %s2, 32
  %v501 = vld [vmem:[%s500] sm:$0xff]
  %v502 = vadd.f32 %v501, %v481
  %503 = vst [vmem:[%s500] sm:$0xff] %v502
  %s504 = scalar_lea.vmem %s2, 40
  %v505 = vld [vmem:[%s504] sm:$0xff]
  %v506 = vadd.f32 %v505, %v483
  %507 = vst [vmem:[%s504] sm:$0xff] %v506
  %s508 = scalar_lea.vmem %s2, 48
  %v509 = vld [vmem:[%s508] sm:$0xff]
  %v510 = vadd.f32 %v509, %v484
  %511 = vst [vmem:[%s508] sm:$0xff] %v510
  // Predicated region
  $region14: #{yolo_loss.1} parent=0 // pred_check
    _
  $region15: #{yolo_loss.1} parent=0 // pred_check_branch
    %513 = sbr.rel (0) target = $region17
  $region16: #{yolo_loss.1} parent=0 // pred_region
    _
  $region17: #{yolo_loss.1} parent=0 // pred_fallthru
    _
  // Predicated region
  $region18: #{yolo_loss.1} parent=0 // pred_check
    _
  $region19: #{yolo_loss.1} parent=0 // pred_check_branch
    %515 = sbr.rel (0) target = $region21
  $region20: #{yolo_loss.1} parent=0 // pred_region
    _
  $region21: #{yolo_loss.1} parent=0 // pred_fallthru
    _

</llo_original>
